<compile_context>
chip_gen: v7x
topology: tpu7x:2x2x1
jax: 0.10.0
libtpu: 0.0.40
codegen_flags: <defaults>
</compile_context>

<pallas_src>
import jax
import jax.numpy as jnp
from jax.experimental import pallas as pl
from jax.experimental.pallas import tpu as pltpu

# ----------------------------- model hyperparams (small) -----------------------------
SAMPLING_RATE = 6400
FRAME_RATE = 25
CHUNK_SIZE = 512
OUTPUT_DIMS = 128          # GRU hidden size
NUM_GRU_LAYERS = 2
STRIDE = SAMPLING_RATE // FRAME_RATE            # 256
PAD = (CHUNK_SIZE - STRIDE) // 2                # 128

B_BLK = 8                  # batch rows per block (one f32 vreg of sublanes)
ENC_T_BLK = 32             # encoder timesteps per grid step (M = 256 rows into the MXU)
GRU_T_BLK = 16             # recurrent timesteps per grid step (amortizes pipeline overhead)
assert ENC_T_BLK % GRU_T_BLK == 0


def _round_up(n, m):
    return ((n + m - 1) // m) * m


# ----------------------------- encoder + layer-0 input projection -----------------------------
# TODO(synk): AudioEncoder's definition is not included in the provided source;
# it is replaced by a deterministic linear(chunk_size -> output_dims) + ReLU.
def _enc_gx0_kernel(x_ref, ew_ref, eb_ref, wih0_ref, bx0_ref, o_ref):
    b_blk, te_blk, chunk = x_ref.shape
    hidden = ew_ref.shape[-1]
    h3 = o_ref.shape[-1]

    # (b_blk, te_blk, chunk) bf16 -> (b_blk*te_blk, chunk); trivial (sublane-aligned) merge.
    x = x_ref[...].reshape(b_blk * te_blk, chunk)
    feat = jnp.dot(x, ew_ref[...], preferred_element_type=jnp.float32) + eb_ref[...]
    feat = jnp.maximum(feat, 0.0)

    # On-chip batch-major -> time-major reorder (static slices; done on the narrow H=128
    # features, cheaper than reordering the 3H-wide gates).
    featb = feat.reshape(b_blk, te_blk, hidden)
    feat_tm = jnp.concatenate([featb[:, t, :] for t in range(te_blk)], axis=0)

    gx0 = jnp.dot(feat_tm.astype(jnp.bfloat16), wih0_ref[...],
                  preferred_element_type=jnp.float32) + bx0_ref[...]
    o_ref[...] = gx0.reshape(te_blk, b_blk, h3)          # dense (time, batch, 3H) writeback


def encoder_gx0(chunks, enc_w, enc_b, w_ih0, bx0):
    # chunks: (Bp, Tp, CHUNK) bf16; enc_w: (CHUNK, H) bf16; w_ih0: (H, 3H) bf16
    Bp, Tp, CH = chunks.shape
    H = enc_w.shape[1]
    H3 = w_ih0.shape[1]
    return pl.pallas_call(
        _enc_gx0_kernel,
        out_shape=jax.ShapeDtypeStruct((Tp, Bp, H3), jnp.float32),
        grid=(Bp // B_BLK, Tp // ENC_T_BLK),
        in_specs=[
            pl.BlockSpec((B_BLK, ENC_T_BLK, CH), lambda b, t: (b, t, 0)),
            pl.BlockSpec((CH, H), lambda b, t: (0, 0)),
            pl.BlockSpec((1, H), lambda b, t: (0, 0)),
            pl.BlockSpec((H, H3), lambda b, t: (0, 0)),
            pl.BlockSpec((1, H3), lambda b, t: (0, 0)),
        ],
        out_specs=pl.BlockSpec((ENC_T_BLK, B_BLK, H3), lambda b, t: (t, b, 0)),
        compiler_params=pltpu.CompilerParams(
            dimension_semantics=("parallel", "parallel")),
    )(chunks, enc_w, enc_b.reshape(1, H), w_ih0, bx0.reshape(1, H3))


# ----------------------------- fused 2-layer GRU recurrence -----------------------------
# PyTorch gate order (r, z, n):
#   r = sigmoid(x W_ir + b_ir + h W_hr + b_hr)
#   z = sigmoid(x W_iz + b_iz + h W_hz + b_hz)
#   n = tanh  (x W_in + b_in + r * (h W_hn + b_hn))
#   h' = (1 - z) * n + z * h  ==  n + z * (h - n)
def _gru2_kernel(gx0_ref, whh0_ref, bhn0_ref, w1_ref, b1_ref, o_ref, h0_scr, h1_scr):
    H = h0_scr.shape[-1]
    t_blk = gx0_ref.shape[0]

    @pl.when(pl.program_id(1) == 0)          # first time-block of this batch-block
    def _():
        h0_scr[...] = jnp.zeros_like(h0_scr)
        h1_scr[...] = jnp.zeros_like(h1_scr)

    # Hoist weight/bias loads out of the timestep loop.
    whh0 = whh0_ref[...]
    bhn0 = bhn0_ref[...]
    w1 = w1_ref[...]                         # (2H, 4H) fused [W_ih1; W_hh1] with zero pads
    b1 = b1_ref[...]                         # (1, 4H)  [b_rz folded, b_ih1_n, b_hh1_n]

    def step(t, carry):
        h0, h1 = carry

        # ---- layer 0: only the hidden matmul is in the recurrence ----
        gx0 = gx0_ref[t]                                     # (B, 3H), biases folded
        gh0 = jnp.dot(h0, whh0, preferred_element_type=jnp.float32)
        rz0 = jax.nn.sigmoid(gx0[:, :2 * H] + gh0[:, :2 * H])
        n0 = jnp.tanh(gx0[:, 2 * H:] + rz0[:, :H] * (gh0[:, 2 * H:] + bhn0))
        h0n = n0 + rz0[:, H:] * (h0 - n0)

        # ---- layer 1: single fused K=2H matmul for gx1 and gh1 ----
        x1 = jnp.concatenate([h0n, h1], axis=1)              # (B, 2H)
        g1 = jnp.dot(x1, w1, preferred_element_type=jnp.float32) + b1   # (B, 4H)
        rz1 = jax.nn.sigmoid(g1[:, :2 * H])
        n1 = jnp.tanh(g1[:, 2 * H:3 * H] + rz1[:, :H] * g1[:, 3 * H:])
        h1n = n1 + rz1[:, H:] * (h1 - n1)

        o_ref[t] = h1n.astype(o_ref.dtype)
        return (h0n, h1n)

    h0f, h1f = jax.lax.fori_loop(0, t_blk, step, (h0_scr[...], h1_scr[...]), unroll=True)
    h0_scr[...] = h0f                        # persist state across time-blocks
    h1_scr[...] = h1f


def gru2(gx0, w_hh0, b_hn0, w1big, b1):
    # gx0: (Tp, Bp, 3H) f32; w_hh0: (H, 3H); w1big: (2H, 4H); b_hn0: (H,); b1: (4H,)
    Tp, Bp, H3 = gx0.shape
    H = H3 // 3
    return pl.pallas_call(
        _gru2_kernel,
        out_shape=jax.ShapeDtypeStruct((Tp, Bp, H), jnp.float32),
        grid=(Bp // B_BLK, Tp // GRU_T_BLK),
        in_specs=[
            pl.BlockSpec((GRU_T_BLK, B_BLK, H3), lambda b, t: (t, b, 0)),
            pl.BlockSpec((H, H3), lambda b, t: (0, 0)),
            pl.BlockSpec((1, H), lambda b, t: (0, 0)),
            pl.BlockSpec((2 * H, 4 * H), lambda b, t: (0, 0)),
            pl.BlockSpec((1, 4 * H), lambda b, t: (0, 0)),
        ],
        out_specs=pl.BlockSpec((GRU_T_BLK, B_BLK, H), lambda b, t: (t, b, 0)),
        scratch_shapes=[pltpu.VMEM((B_BLK, H), jnp.float32),
                        pltpu.VMEM((B_BLK, H), jnp.float32)],
        compiler_params=pltpu.CompilerParams(
            dimension_semantics=("parallel", "arbitrary")),
    )(gx0, w_hh0, b_hn0.reshape(1, H), w1big, b1.reshape(1, 4 * H))


# ----------------------------- parameters -----------------------------
def init_params(key, chunk_size, hidden, num_layers):
    params = {}
    k_enc_w, k_enc_b, key = jax.random.split(key, 3)
    params["enc_w"] = 0.02 * jax.random.normal(k_enc_w, (chunk_size, hidden), jnp.float32)
    params["enc_b"] = 0.02 * jax.random.normal(k_enc_b, (hidden,), jnp.float32)
    for l in range(num_layers):
        hin = hidden  # layer input dim == hidden (encoder output), same as torch module
        k1, k2, k3, k4, key = jax.random.split(key, 5)
        # stored pre-transposed: (Hin, 3H) and (H, 3H) so kernels do x @ W
        params[f"w_ih_{l}"] = 0.05 * jax.random.normal(k1, (hin, 3 * hidden), jnp.float32)
        params[f"w_hh_{l}"] = 0.05 * jax.random.normal(k2, (hidden, 3 * hidden), jnp.float32)
        params[f"b_ih_{l}"] = 0.05 * jax.random.normal(k3, (3 * hidden,), jnp.float32)
        params[f"b_hh_{l}"] = 0.05 * jax.random.normal(k4, (3 * hidden,), jnp.float32)
    return params


# ----------------------------- forward pass -----------------------------
def audio_rnn_forward(x, params):
    """
    x: (batch, channels=1, data)  ->  output: (batch, seq, output_dims)
    """
    assert NUM_GRU_LAYERS == 2
    B, C, L = x.shape
    assert C == 1
    H = OUTPUT_DIMS

    Lp = L + 2 * PAD
    assert CHUNK_SIZE == 2 * STRIDE and Lp % STRIDE == 0
    T = Lp // STRIDE - 1                                   # number of real chunks/timesteps

    # Pad batch to a vreg-full multiple of 8 and pad T up to a multiple of the time block
    # by extending the right zero-pad (framing then yields exactly Tp chunks; trailing
    # padded timesteps cannot influence earlier outputs of the causal recurrence).
    Tp = _round_up(T, ENC_T_BLK)
    Bp = _round_up(B, B_BLK)
    extra = (Tp - T) * STRIDE
    xp = jnp.pad(x[:, 0, :], ((0, Bp - B), (PAD, PAD + extra)))     # (Bp, (Tp+1)*STRIDE)

    # __padding1D + __audio_split as one framing op: chunk t == concat(frame t, frame t+1).
    frames = xp.reshape(Bp, Tp + 1, STRIDE)
    chunks = jnp.concatenate([frames[:, :-1, :], frames[:, 1:, :]], axis=-1)   # (Bp, Tp, CHUNK)
    chunks = chunks.astype(jnp.bfloat16)

    # Bias folding (once, on tiny arrays): b_hh for r,z gates folds into the input-side
    # bias; b_hn stays separate because of r * (h W_hn + b_hn).
    b_ih0, b_hh0 = params["b_ih_0"], params["b_hh_0"]
    b_ih1, b_hh1 = params["b_ih_1"], params["b_hh_1"]
    bx0 = jnp.concatenate([b_ih0[:2 * H] + b_hh0[:2 * H], b_ih0[2 * H:]])
    b_hn0 = b_hh0[2 * H:]

    # Fused layer-1 weight: [h0n | h1] @ w1big gives [rz_combined | gx1_n | gh1_n].
    wih1, whh1 = params["w_ih_1"], params["w_hh_1"]
    zeros_hh = jnp.zeros((H, H), jnp.float32)
    w1big = jnp.concatenate([
        jnp.concatenate([wih1[:, :2 * H], wih1[:, 2 * H:], zeros_hh], axis=1),
        jnp.concatenate([whh1[:, :2 * H], zeros_hh, whh1[:, 2 * H:]], axis=1),
    ], axis=0)                                                        # (2H, 4H)
    b1 = jnp.concatenate([b_ih1[:2 * H] + b_hh1[:2 * H], b_ih1[2 * H:], b_hh1[2 * H:]])

    # Encoder fused with layer-0 input projection, writing gx0 seq-major (Tp, Bp, 3H).
    gx0 = encoder_gx0(chunks,
                      params["enc_w"].astype(jnp.bfloat16), params["enc_b"],
                      params["w_ih_0"].astype(jnp.bfloat16), bx0)

    out_tbh = gru2(gx0, params["w_hh_0"], b_hn0, w1big, b1)           # (Tp, Bp, H)
    return out_tbh[:T, :B, :].transpose(1, 0, 2)                      # (B, T, H)


# ----------------------------- pure-JAX reference (for correctness check) -----------------------------
def reference_forward(x, params):
    B, C, L = x.shape
    H = OUTPUT_DIMS
    xp = jnp.pad(x[:, 0, :], ((0, 0), (PAD, PAD)))
    Lp = L + 2 * PAD
    starts = list(range(0, Lp + 1 - CHUNK_SIZE, STRIDE))
    chunks = jnp.stack([xp[:, i:i + CHUNK_SIZE] for i in starts], axis=1)  # (B, T, chunk)
    T = len(starts)
    feat = jnp.maximum(chunks.reshape(B * T, CHUNK_SIZE) @ params["enc_w"]
                       + params["enc_b"], 0.0)
    h_seq = feat.reshape(B, T, H)
    for l in range(NUM_GRU_LAYERS):
        wih, whh = params[f"w_ih_{l}"], params[f"w_hh_{l}"]
        bih, bhh = params[f"b_ih_{l}"], params[f"b_hh_{l}"]

        def step(h, x_t):
            gx = x_t @ wih + bih
            gh = h @ whh + bhh
            r = jax.nn.sigmoid(gx[:, :H] + gh[:, :H])
            z = jax.nn.sigmoid(gx[:, H:2 * H] + gh[:, H:2 * H])
            n = jnp.tanh(gx[:, 2 * H:] + r * gh[:, 2 * H:])
            h_new = (1.0 - z) * n + z * h
            return h_new, h_new

        _, ys = jax.lax.scan(step, jnp.zeros((B, H), jnp.float32),
                             jnp.transpose(h_seq, (1, 0, 2)))
        h_seq = jnp.transpose(ys, (1, 0, 2))
    return h_seq


if __name__ == "__main__":
    key = jax.random.PRNGKey(0)
    k_x, k_p = jax.random.split(key)

    B, C, L = 2, 1, 2048
    x = jax.random.normal(k_x, (B, C, L), jnp.float32)
    params = init_params(k_p, CHUNK_SIZE, OUTPUT_DIMS, NUM_GRU_LAYERS)

    out = jax.block_until_ready(audio_rnn_forward(x, params))

    expected_T = len(range(0, L + 2 * PAD + 1 - CHUNK_SIZE, STRIDE))
    assert out.shape == (B, expected_T, OUTPUT_DIMS), out.shape
    assert bool(jnp.all(jnp.isfinite(out)))

    ref = jax.block_until_ready(reference_forward(x, params))
    err = float(jnp.max(jnp.abs(out - ref)))
    # Tolerance accounts for bf16 encoder-matmul inputs (reference runs fully in f32).
    assert err < 1e-1, f"mismatch vs reference: {err}"

    print("KERNEL_OK")
</pallas_src>

<mosaic_0001>
module attributes {stable_mosaic.version = 11 : i64} {
  func.func @_enc_gx0_kernel(%arg0: i32, %arg1: i32, %arg2: memref<8x32x512xbf16, #tpu.memory_space<vmem>>, %arg3: memref<512x128xbf16, #tpu.memory_space<vmem>>, %arg4: memref<1x128xf32, #tpu.memory_space<vmem>>, %arg5: memref<128x384xbf16, #tpu.memory_space<vmem>>, %arg6: memref<1x384xf32, #tpu.memory_space<vmem>>, %arg7: memref<32x8x384xf32, #tpu.memory_space<vmem>>) attributes {dimension_semantics = [#tpu.dimension_semantics<parallel>, #tpu.dimension_semantics<parallel>], iteration_bounds = array<i64: 1, 1>, scalar_prefetch = 0 : i64, scratch_operands = 0 : i64, tpu.core_type = #tpu.core_type<tc>, window_params = [{transform_indices = @transform_0, window_bounds = array<i64: 8, 32, 512>}, {pipeline_mode = #tpu.pipeline_mode<synchronous>, transform_indices = @transform_1, window_bounds = array<i64: 512, 128>}, {pipeline_mode = #tpu.pipeline_mode<synchronous>, transform_indices = @transform_2, window_bounds = array<i64: 1, 128>}, {pipeline_mode = #tpu.pipeline_mode<synchronous>, transform_indices = @transform_3, window_bounds = array<i64: 128, 384>}, {pipeline_mode = #tpu.pipeline_mode<synchronous>, transform_indices = @transform_4, window_bounds = array<i64: 1, 384>}, {transform_indices = @transform_5, window_bounds = array<i64: 32, 8, 384>}]} {
    %c0 = arith.constant 0 : index
    %c0_0 = arith.constant 0 : index
    %c0_1 = arith.constant 0 : index
    %0 = vector.load %arg2[%c0, %c0_0, %c0_1] : memref<8x32x512xbf16, #tpu.memory_space<vmem>>, vector<8x32x512xbf16>
    %1 = vector.shape_cast %0 : vector<8x32x512xbf16> to vector<256x512xbf16>
    %c0_2 = arith.constant 0 : index
    %c0_3 = arith.constant 0 : index
    %2 = vector.load %arg3[%c0_2, %c0_3] : memref<512x128xbf16, #tpu.memory_space<vmem>>, vector<512x128xbf16>
    %cst = arith.constant dense<0.000000e+00> : vector<256x128xf32>
    %3 = tpu.matmul %1, %2, %cst {dimension_numbers = #tpu.dot_dimension_numbers<[1], [0], [0], [1], [0, 0, 1, 1], [], []>} : vector<256x512xbf16>, vector<512x128xbf16>, vector<256x128xf32> -> vector<256x128xf32>
    %c0_4 = arith.constant 0 : index
    %c0_5 = arith.constant 0 : index
    %4 = vector.load %arg4[%c0_4, %c0_5] : memref<1x128xf32, #tpu.memory_space<vmem>>, vector<1x128xf32>
    %5 = vector.broadcast %4 : vector<1x128xf32> to vector<256x128xf32>
    %6 = arith.addf %3, %5 : vector<256x128xf32>
    %cst_6 = arith.constant 0.000000e+00 : f32
    %7 = vector.broadcast %cst_6 : f32 to vector<256x128xf32>
    %8 = arith.maximumf %6, %7 : vector<256x128xf32>
    %9 = vector.shape_cast %8 : vector<256x128xf32> to vector<8x32x128xf32>
    %10 = vector.extract_strided_slice %9 {offsets = [0, 0, 0], sizes = [8, 1, 128], strides = [1, 1, 1]} : vector<8x32x128xf32> to vector<8x1x128xf32>
    %11 = vector.shape_cast %10 : vector<8x1x128xf32> to vector<8x128xf32>
    %12 = vector.extract_strided_slice %9 {offsets = [0, 1, 0], sizes = [8, 1, 128], strides = [1, 1, 1]} : vector<8x32x128xf32> to vector<8x1x128xf32>
    %13 = vector.shape_cast %12 : vector<8x1x128xf32> to vector<8x128xf32>
    %14 = vector.extract_strided_slice %9 {offsets = [0, 2, 0], sizes = [8, 1, 128], strides = [1, 1, 1]} : vector<8x32x128xf32> to vector<8x1x128xf32>
    %15 = vector.shape_cast %14 : vector<8x1x128xf32> to vector<8x128xf32>
    %16 = vector.extract_strided_slice %9 {offsets = [0, 3, 0], sizes = [8, 1, 128], strides = [1, 1, 1]} : vector<8x32x128xf32> to vector<8x1x128xf32>
    %17 = vector.shape_cast %16 : vector<8x1x128xf32> to vector<8x128xf32>
    %18 = vector.extract_strided_slice %9 {offsets = [0, 4, 0], sizes = [8, 1, 128], strides = [1, 1, 1]} : vector<8x32x128xf32> to vector<8x1x128xf32>
    %19 = vector.shape_cast %18 : vector<8x1x128xf32> to vector<8x128xf32>
    %20 = vector.extract_strided_slice %9 {offsets = [0, 5, 0], sizes = [8, 1, 128], strides = [1, 1, 1]} : vector<8x32x128xf32> to vector<8x1x128xf32>
    %21 = vector.shape_cast %20 : vector<8x1x128xf32> to vector<8x128xf32>
    %22 = vector.extract_strided_slice %9 {offsets = [0, 6, 0], sizes = [8, 1, 128], strides = [1, 1, 1]} : vector<8x32x128xf32> to vector<8x1x128xf32>
    %23 = vector.shape_cast %22 : vector<8x1x128xf32> to vector<8x128xf32>
    %24 = vector.extract_strided_slice %9 {offsets = [0, 7, 0], sizes = [8, 1, 128], strides = [1, 1, 1]} : vector<8x32x128xf32> to vector<8x1x128xf32>
    %25 = vector.shape_cast %24 : vector<8x1x128xf32> to vector<8x128xf32>
    %26 = vector.extract_strided_slice %9 {offsets = [0, 8, 0], sizes = [8, 1, 128], strides = [1, 1, 1]} : vector<8x32x128xf32> to vector<8x1x128xf32>
    %27 = vector.shape_cast %26 : vector<8x1x128xf32> to vector<8x128xf32>
    %28 = vector.extract_strided_slice %9 {offsets = [0, 9, 0], sizes = [8, 1, 128], strides = [1, 1, 1]} : vector<8x32x128xf32> to vector<8x1x128xf32>
    %29 = vector.shape_cast %28 : vector<8x1x128xf32> to vector<8x128xf32>
    %30 = vector.extract_strided_slice %9 {offsets = [0, 10, 0], sizes = [8, 1, 128], strides = [1, 1, 1]} : vector<8x32x128xf32> to vector<8x1x128xf32>
    %31 = vector.shape_cast %30 : vector<8x1x128xf32> to vector<8x128xf32>
    %32 = vector.extract_strided_slice %9 {offsets = [0, 11, 0], sizes = [8, 1, 128], strides = [1, 1, 1]} : vector<8x32x128xf32> to vector<8x1x128xf32>
    %33 = vector.shape_cast %32 : vector<8x1x128xf32> to vector<8x128xf32>
    %34 = vector.extract_strided_slice %9 {offsets = [0, 12, 0], sizes = [8, 1, 128], strides = [1, 1, 1]} : vector<8x32x128xf32> to vector<8x1x128xf32>
    %35 = vector.shape_cast %34 : vector<8x1x128xf32> to vector<8x128xf32>
    %36 = vector.extract_strided_slice %9 {offsets = [0, 13, 0], sizes = [8, 1, 128], strides = [1, 1, 1]} : vector<8x32x128xf32> to vector<8x1x128xf32>
    %37 = vector.shape_cast %36 : vector<8x1x128xf32> to vector<8x128xf32>
    %38 = vector.extract_strided_slice %9 {offsets = [0, 14, 0], sizes = [8, 1, 128], strides = [1, 1, 1]} : vector<8x32x128xf32> to vector<8x1x128xf32>
    %39 = vector.shape_cast %38 : vector<8x1x128xf32> to vector<8x128xf32>
    %40 = vector.extract_strided_slice %9 {offsets = [0, 15, 0], sizes = [8, 1, 128], strides = [1, 1, 1]} : vector<8x32x128xf32> to vector<8x1x128xf32>
    %41 = vector.shape_cast %40 : vector<8x1x128xf32> to vector<8x128xf32>
    %42 = vector.extract_strided_slice %9 {offsets = [0, 16, 0], sizes = [8, 1, 128], strides = [1, 1, 1]} : vector<8x32x128xf32> to vector<8x1x128xf32>
    %43 = vector.shape_cast %42 : vector<8x1x128xf32> to vector<8x128xf32>
    %44 = vector.extract_strided_slice %9 {offsets = [0, 17, 0], sizes = [8, 1, 128], strides = [1, 1, 1]} : vector<8x32x128xf32> to vector<8x1x128xf32>
    %45 = vector.shape_cast %44 : vector<8x1x128xf32> to vector<8x128xf32>
    %46 = vector.extract_strided_slice %9 {offsets = [0, 18, 0], sizes = [8, 1, 128], strides = [1, 1, 1]} : vector<8x32x128xf32> to vector<8x1x128xf32>
    %47 = vector.shape_cast %46 : vector<8x1x128xf32> to vector<8x128xf32>
    %48 = vector.extract_strided_slice %9 {offsets = [0, 19, 0], sizes = [8, 1, 128], strides = [1, 1, 1]} : vector<8x32x128xf32> to vector<8x1x128xf32>
    %49 = vector.shape_cast %48 : vector<8x1x128xf32> to vector<8x128xf32>
    %50 = vector.extract_strided_slice %9 {offsets = [0, 20, 0], sizes = [8, 1, 128], strides = [1, 1, 1]} : vector<8x32x128xf32> to vector<8x1x128xf32>
    %51 = vector.shape_cast %50 : vector<8x1x128xf32> to vector<8x128xf32>
    %52 = vector.extract_strided_slice %9 {offsets = [0, 21, 0], sizes = [8, 1, 128], strides = [1, 1, 1]} : vector<8x32x128xf32> to vector<8x1x128xf32>
    %53 = vector.shape_cast %52 : vector<8x1x128xf32> to vector<8x128xf32>
    %54 = vector.extract_strided_slice %9 {offsets = [0, 22, 0], sizes = [8, 1, 128], strides = [1, 1, 1]} : vector<8x32x128xf32> to vector<8x1x128xf32>
    %55 = vector.shape_cast %54 : vector<8x1x128xf32> to vector<8x128xf32>
    %56 = vector.extract_strided_slice %9 {offsets = [0, 23, 0], sizes = [8, 1, 128], strides = [1, 1, 1]} : vector<8x32x128xf32> to vector<8x1x128xf32>
    %57 = vector.shape_cast %56 : vector<8x1x128xf32> to vector<8x128xf32>
    %58 = vector.extract_strided_slice %9 {offsets = [0, 24, 0], sizes = [8, 1, 128], strides = [1, 1, 1]} : vector<8x32x128xf32> to vector<8x1x128xf32>
    %59 = vector.shape_cast %58 : vector<8x1x128xf32> to vector<8x128xf32>
    %60 = vector.extract_strided_slice %9 {offsets = [0, 25, 0], sizes = [8, 1, 128], strides = [1, 1, 1]} : vector<8x32x128xf32> to vector<8x1x128xf32>
    %61 = vector.shape_cast %60 : vector<8x1x128xf32> to vector<8x128xf32>
    %62 = vector.extract_strided_slice %9 {offsets = [0, 26, 0], sizes = [8, 1, 128], strides = [1, 1, 1]} : vector<8x32x128xf32> to vector<8x1x128xf32>
    %63 = vector.shape_cast %62 : vector<8x1x128xf32> to vector<8x128xf32>
    %64 = vector.extract_strided_slice %9 {offsets = [0, 27, 0], sizes = [8, 1, 128], strides = [1, 1, 1]} : vector<8x32x128xf32> to vector<8x1x128xf32>
    %65 = vector.shape_cast %64 : vector<8x1x128xf32> to vector<8x128xf32>
    %66 = vector.extract_strided_slice %9 {offsets = [0, 28, 0], sizes = [8, 1, 128], strides = [1, 1, 1]} : vector<8x32x128xf32> to vector<8x1x128xf32>
    %67 = vector.shape_cast %66 : vector<8x1x128xf32> to vector<8x128xf32>
    %68 = vector.extract_strided_slice %9 {offsets = [0, 29, 0], sizes = [8, 1, 128], strides = [1, 1, 1]} : vector<8x32x128xf32> to vector<8x1x128xf32>
    %69 = vector.shape_cast %68 : vector<8x1x128xf32> to vector<8x128xf32>
    %70 = vector.extract_strided_slice %9 {offsets = [0, 30, 0], sizes = [8, 1, 128], strides = [1, 1, 1]} : vector<8x32x128xf32> to vector<8x1x128xf32>
    %71 = vector.shape_cast %70 : vector<8x1x128xf32> to vector<8x128xf32>
    %72 = vector.extract_strided_slice %9 {offsets = [0, 31, 0], sizes = [8, 1, 128], strides = [1, 1, 1]} : vector<8x32x128xf32> to vector<8x1x128xf32>
    %73 = vector.shape_cast %72 : vector<8x1x128xf32> to vector<8x128xf32>
    %74 = tpu.concatenate %11, %13, %15, %17, %19, %21, %23, %25, %27, %29, %31, %33, %35, %37, %39, %41 in 0 : vector<8x128xf32>, vector<8x128xf32>, vector<8x128xf32>, vector<8x128xf32>, vector<8x128xf32>, vector<8x128xf32>, vector<8x128xf32>, vector<8x128xf32>, vector<8x128xf32>, vector<8x128xf32>, vector<8x128xf32>, vector<8x128xf32>, vector<8x128xf32>, vector<8x128xf32>, vector<8x128xf32>, vector<8x128xf32> -> vector<128x128xf32>
    %75 = tpu.concatenate %43, %45, %47, %49, %51, %53, %55, %57, %59, %61, %63, %65, %67, %69, %71, %73 in 0 : vector<8x128xf32>, vector<8x128xf32>, vector<8x128xf32>, vector<8x128xf32>, vector<8x128xf32>, vector<8x128xf32>, vector<8x128xf32>, vector<8x128xf32>, vector<8x128xf32>, vector<8x128xf32>, vector<8x128xf32>, vector<8x128xf32>, vector<8x128xf32>, vector<8x128xf32>, vector<8x128xf32>, vector<8x128xf32> -> vector<128x128xf32>
    %76 = tpu.concatenate %74, %75 in 0 : vector<128x128xf32>, vector<128x128xf32> -> vector<256x128xf32>
    %77 = arith.truncf %76 : vector<256x128xf32> to vector<256x128xbf16>
    %c0_7 = arith.constant 0 : index
    %c0_8 = arith.constant 0 : index
    %78 = vector.load %arg5[%c0_7, %c0_8] : memref<128x384xbf16, #tpu.memory_space<vmem>>, vector<128x384xbf16>
    %cst_9 = arith.constant dense<0.000000e+00> : vector<256x384xf32>
    %79 = tpu.matmul %77, %78, %cst_9 {dimension_numbers = #tpu.dot_dimension_numbers<[1], [0], [0], [1], [0, 0, 1, 1], [], []>} : vector<256x128xbf16>, vector<128x384xbf16>, vector<256x384xf32> -> vector<256x384xf32>
    %c0_10 = arith.constant 0 : index
    %c0_11 = arith.constant 0 : index
    %80 = vector.load %arg6[%c0_10, %c0_11] : memref<1x384xf32, #tpu.memory_space<vmem>>, vector<1x384xf32>
    %81 = vector.broadcast %80 : vector<1x384xf32> to vector<256x384xf32>
    %82 = arith.addf %79, %81 : vector<256x384xf32>
    %83 = vector.shape_cast %82 : vector<256x384xf32> to vector<32x8x384xf32>
    %c0_12 = arith.constant 0 : index
    %c0_13 = arith.constant 0 : index
    %c0_14 = arith.constant 0 : index
    %84 = vector.load %arg7[%c0_12, %c0_13, %c0_14] : memref<32x8x384xf32, #tpu.memory_space<vmem>>, vector<32x8x384xf32>
    tpu.vector_store %arg7[%c0_12, %c0_13, %c0_14], %83 {strides = array<i32>} : memref<32x8x384xf32, #tpu.memory_space<vmem>>, vector<32x8x384xf32>,
    return
  }
  func.func @transform_0(%arg0: i32, %arg1: i32) -> (i32, i32, i32) {
    %c0_i32 = arith.constant 0 : i32
    %c0_i32_0 = arith.constant 0 : i32
    return %arg0, %arg1, %c0_i32 : i32, i32, i32
  }
  func.func @transform_1(%arg0: i32, %arg1: i32) -> (i32, i32) {
    %c0_i32 = arith.constant 0 : i32
    %c0_i32_0 = arith.constant 0 : i32
    %c0_i32_1 = arith.constant 0 : i32
    return %c0_i32, %c0_i32_0 : i32, i32
  }
  func.func @transform_2(%arg0: i32, %arg1: i32) -> (i32, i32) {
    %c0_i32 = arith.constant 0 : i32
    %c0_i32_0 = arith.constant 0 : i32
    %c0_i32_1 = arith.constant 0 : i32
    return %c0_i32, %c0_i32_0 : i32, i32
  }
  func.func @transform_3(%arg0: i32, %arg1: i32) -> (i32, i32) {
    %c0_i32 = arith.constant 0 : i32
    %c0_i32_0 = arith.constant 0 : i32
    %c0_i32_1 = arith.constant 0 : i32
    return %c0_i32, %c0_i32_0 : i32, i32
  }
  func.func @transform_4(%arg0: i32, %arg1: i32) -> (i32, i32) {
    %c0_i32 = arith.constant 0 : i32
    %c0_i32_0 = arith.constant 0 : i32
    %c0_i32_1 = arith.constant 0 : i32
    return %c0_i32, %c0_i32_0 : i32, i32
  }
  func.func @transform_5(%arg0: i32, %arg1: i32) -> (i32, i32, i32) {
    %c0_i32 = arith.constant 0 : i32
    %c0_i32_0 = arith.constant 0 : i32
    return %arg1, %arg0, %c0_i32 : i32, i32, i32
  }
}

</mosaic_0001>

<llo_original>
// kernel: tpu_custom_call.1
$region0: #{tpu_custom_call.1}
  #allocation0 [shape = 'u32[]', space=smem, size = 0x4, offset = 0x4, fixed_abs, tag = 'smem constant byte address 0x4 - core index']
  #allocation1 [shape = 'u32[144,128]{1,0:T(1,128)}', space=vmem, size = 0x12000, scoped, tag = 'internal scratch']
  %s0 = inlined_call_operand.hbm [shape: bf16[8,32,512], index: 0, kind: input, shape index: {}]
  %s1 = inlined_call_operand.hbm [shape: bf16[512,128], index: 1, kind: input, shape index: {}]
  %s2 = inlined_call_operand.vmem [shape: f32[1,128], index: 2, kind: input, shape index: {}]
  %s3 = inlined_call_operand.hbm [shape: bf16[128,384], index: 3, kind: input, shape index: {}]
  %s4 = inlined_call_operand.vmem [shape: f32[1,384], index: 4, kind: input, shape index: {}]
  %s5 = inlined_call_operand.hbm [shape: f32[32,8,384], index: 5, kind: output, shape index: {}]
  %s6 = sld [smem:[#allocation0]]
  $region42: #{tpu_custom_call.1} parent=0
    _
  %s8 = ssub.s32 1, %s6
  %s9 = scalar_select 0, %s8, %s6
  $region1: #{tpu_custom_call.1} parent=0
    #allocation2 [shape = 'u8[262144]{0}', space=vmem, size = 0x40000, scoped, tag = 'input window, operand 0, single buffered']
    #allocation3 [shape = 's32[1]{0}', space=sflag, size = 0x4, scoped, tag = 'scoped memory for tpu_custom_call.1']
    #allocation4 [shape = 's32[1]{0}', space=sflag, size = 0x4, scoped, tag = 'scoped memory for tpu_custom_call.1']
    #allocation5 [shape = 'u8[131072]{0}', space=vmem, size = 0x20000, scoped, tag = 'input window, operand 1, single buffered']
    #allocation6 [shape = 's32[1]{0}', space=sflag, size = 0x4, scoped, tag = 'scoped memory for tpu_custom_call.1']
    #allocation7 [shape = 'u8[98304]{0}', space=vmem, size = 0x18000, scoped, tag = 'input window, operand 3, single buffered']
    #allocation8 [shape = 'u8[393216]{0}', space=vmem, size = 0x60000, scoped, tag = 'output window, operand 0, single buffered']
    %10 = vsyncpa [#allocation3], 0
    %11 = vsyncpa [#allocation6], 0
    %12 = vsyncpa [#allocation4], 0
    // Predicated region
    $region2: #{tpu_custom_call.1} parent=1 // pred_check
      _
    $region3: #{tpu_custom_call.1} parent=1 // pred_check_branch
      %14 = sbr.rel (0) target = $region5
    $region4: #{tpu_custom_call.1} parent=1 // pred_region
      %s16 = ssub.s32 8192, 8192
      %17 = vsyncadd [#allocation3], %s16
      %s18 = sshll.u32 [#allocation2], 4
      %s19 = int_to_ptr.vmem [resolvable:$true] %s18
      %24 = dma.hbm_to_vmem [thread:$0]  %s0, 8192, %s19, [#allocation3], 256, 256, 16
    $region5: #{tpu_custom_call.1} parent=1 // pred_fallthru
      _
    // Predicated region
    $region6: #{tpu_custom_call.1} parent=1 // pred_check
      _
    $region7: #{tpu_custom_call.1} parent=1 // pred_check_branch
      %26 = sbr.rel (0) target = $region9
    $region8: #{tpu_custom_call.1} parent=1 // pred_region
      %s28 = ssub.s32 4096, 4096
      %29 = vsyncadd [#allocation6], %s28
      %s30 = sshll.u32 [#allocation5], 4
      %s31 = int_to_ptr.vmem [resolvable:$true] %s30
      %36 = dma.hbm_to_vmem [thread:$0]  %s1, 4096, %s31, [#allocation6], 64, 64, 4
    $region9: #{tpu_custom_call.1} parent=1 // pred_fallthru
      _
    // Predicated region
    $region10: #{tpu_custom_call.1} parent=1 // pred_check
      _
    $region11: #{tpu_custom_call.1} parent=1 // pred_check_branch
      %38 = sbr.rel (0) target = $region13
    $region12: #{tpu_custom_call.1} parent=1 // pred_region
      _
    $region13: #{tpu_custom_call.1} parent=1 // pred_fallthru
      _
    // Predicated region
    $region14: #{tpu_custom_call.1} parent=1 // pred_check
      _
    $region15: #{tpu_custom_call.1} parent=1 // pred_check_branch
      %40 = sbr.rel (0) target = $region17
    $region16: #{tpu_custom_call.1} parent=1 // pred_region
      %s42 = ssub.s32 3072, 3072
      %43 = vsyncadd [#allocation6], %s42
      %s44 = sshll.u32 [#allocation7], 4
      %s45 = int_to_ptr.vmem [resolvable:$true] %s44
      %50 = dma.hbm_to_vmem [thread:$0]  %s3, 3072, %s45, [#allocation6], 192, 192, 12
    $region17: #{tpu_custom_call.1} parent=1 // pred_fallthru
      _
    // Predicated region
    $region18: #{tpu_custom_call.1} parent=1 // pred_check
      _
    $region19: #{tpu_custom_call.1} parent=1 // pred_check_branch
      %52 = sbr.rel (0) target = $region21
    $region20: #{tpu_custom_call.1} parent=1 // pred_region
      _
    $region21: #{tpu_custom_call.1} parent=1 // pred_fallthru
      _
    // Predicated region
    $region22: #{tpu_custom_call.1} parent=1 // pred_check
      _
    $region23: #{tpu_custom_call.1} parent=1 // pred_check_branch
      %54 = sbr.rel (0) target = $region25
    $region24: #{tpu_custom_call.1} parent=1 // pred_region
      %55 = dma.done [#allocation3], 8192
    $region25: #{tpu_custom_call.1} parent=1 // pred_fallthru
      _
    // Predicated region
    $region26: #{tpu_custom_call.1} parent=1 // pred_check
      _
    $region27: #{tpu_custom_call.1} parent=1 // pred_check_branch
      %57 = sbr.rel (0) target = $region29
    $region28: #{tpu_custom_call.1} parent=1 // pred_region
      %58 = dma.done [#allocation6], 4096
    $region29: #{tpu_custom_call.1} parent=1 // pred_fallthru
      _
    // Predicated region
    $region30: #{tpu_custom_call.1} parent=1 // pred_check
      _
    $region31: #{tpu_custom_call.1} parent=1 // pred_check_branch
      %60 = sbr.rel (0) target = $region33
    $region32: #{tpu_custom_call.1} parent=1 // pred_region
      %61 = dma.done [#allocation6], 3072
    $region33: #{tpu_custom_call.1} parent=1 // pred_fallthru
      _
    %v63 = vld [vmem:[#allocation2] sm:$0xff]
    %v64 = vld [vmem:[#allocation2 + $0x8] sm:$0xff]
    %v65 = vld [vmem:[#allocation2 + $0x10] sm:$0xff]
    %v66 = vld [vmem:[#allocation2 + $0x18] sm:$0xff]
    %v67 = vld [vmem:[#allocation2 + $0x20] sm:$0xff]
    %v68 = vld [vmem:[#allocation2 + $0x28] sm:$0xff]
    %v69 = vld [vmem:[#allocation2 + $0x30] sm:$0xff]
    %v70 = vld [vmem:[#allocation2 + $0x38] sm:$0xff]
    %v71 = vld [vmem:[#allocation2 + $0x40] sm:$0xff]
    %v72 = vld [vmem:[#allocation2 + $0x48] sm:$0xff]
    %v73 = vld [vmem:[#allocation2 + $0x50] sm:$0xff]
    %v74 = vld [vmem:[#allocation2 + $0x58] sm:$0xff]
    %v75 = vld [vmem:[#allocation2 + $0x60] sm:$0xff]
    %v76 = vld [vmem:[#allocation2 + $0x68] sm:$0xff]
    %v77 = vld [vmem:[#allocation2 + $0x70] sm:$0xff]
    %v78 = vld [vmem:[#allocation2 + $0x78] sm:$0xff]
    %v79 = vld [vmem:[#allocation2 + $0x80] sm:$0xff]
    %v80 = vld [vmem:[#allocation2 + $0x88] sm:$0xff]
    %v81 = vld [vmem:[#allocation2 + $0x90] sm:$0xff]
    %v82 = vld [vmem:[#allocation2 + $0x98] sm:$0xff]
    %v83 = vld [vmem:[#allocation2 + $0xa0] sm:$0xff]
    %v84 = vld [vmem:[#allocation2 + $0xa8] sm:$0xff]
    %v85 = vld [vmem:[#allocation2 + $0xb0] sm:$0xff]
    %v86 = vld [vmem:[#allocation2 + $0xb8] sm:$0xff]
    %v87 = vld [vmem:[#allocation2 + $0xc0] sm:$0xff]
    %v88 = vld [vmem:[#allocation2 + $0xc8] sm:$0xff]
    %v89 = vld [vmem:[#allocation2 + $0xd0] sm:$0xff]
    %v90 = vld [vmem:[#allocation2 + $0xd8] sm:$0xff]
    %v91 = vld [vmem:[#allocation2 + $0xe0] sm:$0xff]
    %v92 = vld [vmem:[#allocation2 + $0xe8] sm:$0xff]
    %v93 = vld [vmem:[#allocation2 + $0xf0] sm:$0xff]
    %v94 = vld [vmem:[#allocation2 + $0xf8] sm:$0xff]
    %v95 = vld [vmem:[#allocation2 + $0x100] sm:$0xff]
    %v96 = vld [vmem:[#allocation2 + $0x108] sm:$0xff]
    %v97 = vld [vmem:[#allocation2 + $0x110] sm:$0xff]
    %v98 = vld [vmem:[#allocation2 + $0x118] sm:$0xff]
    %v99 = vld [vmem:[#allocation2 + $0x120] sm:$0xff]
    %v100 = vld [vmem:[#allocation2 + $0x128] sm:$0xff]
    %v101 = vld [vmem:[#allocation2 + $0x130] sm:$0xff]
    %v102 = vld [vmem:[#allocation2 + $0x138] sm:$0xff]
    %v103 = vld [vmem:[#allocation2 + $0x140] sm:$0xff]
    %v104 = vld [vmem:[#allocation2 + $0x148] sm:$0xff]
    %v105 = vld [vmem:[#allocation2 + $0x150] sm:$0xff]
    %v106 = vld [vmem:[#allocation2 + $0x158] sm:$0xff]
    %v107 = vld [vmem:[#allocation2 + $0x160] sm:$0xff]
    %v108 = vld [vmem:[#allocation2 + $0x168] sm:$0xff]
    %v109 = vld [vmem:[#allocation2 + $0x170] sm:$0xff]
    %v110 = vld [vmem:[#allocation2 + $0x178] sm:$0xff]
    %v111 = vld [vmem:[#allocation2 + $0x180] sm:$0xff]
    %v112 = vld [vmem:[#allocation2 + $0x188] sm:$0xff]
    %v113 = vld [vmem:[#allocation2 + $0x190] sm:$0xff]
    %v114 = vld [vmem:[#allocation2 + $0x198] sm:$0xff]
    %v115 = vld [vmem:[#allocation2 + $0x1a0] sm:$0xff]
    %v116 = vld [vmem:[#allocation2 + $0x1a8] sm:$0xff]
    %v117 = vld [vmem:[#allocation2 + $0x1b0] sm:$0xff]
    %v118 = vld [vmem:[#allocation2 + $0x1b8] sm:$0xff]
    %v119 = vld [vmem:[#allocation2 + $0x1c0] sm:$0xff]
    %v120 = vld [vmem:[#allocation2 + $0x1c8] sm:$0xff]
    %v121 = vld [vmem:[#allocation2 + $0x1d0] sm:$0xff]
    %v122 = vld [vmem:[#allocation2 + $0x1d8] sm:$0xff]
    %v123 = vld [vmem:[#allocation2 + $0x1e0] sm:$0xff]
    %v124 = vld [vmem:[#allocation2 + $0x1e8] sm:$0xff]
    %v125 = vld [vmem:[#allocation2 + $0x1f0] sm:$0xff]
    %v126 = vld [vmem:[#allocation2 + $0x1f8] sm:$0xff]
    %v127 = vld [vmem:[#allocation5] sm:$0xf]
    %v128 = vld [vmem:[#allocation5 + $0x4] sm:$0xf]
    %v129 = vld [vmem:[#allocation5 + $0x8] sm:$0xf]
    %v130 = vld [vmem:[#allocation5 + $0xc] sm:$0xf]
    %v131 = vld [vmem:[#allocation5 + $0x10] sm:$0xf]
    %v132 = vld [vmem:[#allocation5 + $0x14] sm:$0xf]
    %v133 = vld [vmem:[#allocation5 + $0x18] sm:$0xf]
    %v134 = vld [vmem:[#allocation5 + $0x1c] sm:$0xf]
    %v135 = vld [vmem:[#allocation5 + $0x20] sm:$0xf]
    %v136 = vld [vmem:[#allocation5 + $0x24] sm:$0xf]
    %v137 = vld [vmem:[#allocation5 + $0x28] sm:$0xf]
    %v138 = vld [vmem:[#allocation5 + $0x2c] sm:$0xf]
    %v139 = vld [vmem:[#allocation5 + $0x30] sm:$0xf]
    %v140 = vld [vmem:[#allocation5 + $0x34] sm:$0xf]
    %v141 = vld [vmem:[#allocation5 + $0x38] sm:$0xf]
    %v142 = vld [vmem:[#allocation5 + $0x3c] sm:$0xf]
    %v143 = vld [vmem:[#allocation5 + $0x40] sm:$0xf]
    %v144 = vld [vmem:[#allocation5 + $0x44] sm:$0xf]
    %v145 = vld [vmem:[#allocation5 + $0x48] sm:$0xf]
    %v146 = vld [vmem:[#allocation5 + $0x4c] sm:$0xf]
    %v147 = vld [vmem:[#allocation5 + $0x50] sm:$0xf]
    %v148 = vld [vmem:[#allocation5 + $0x54] sm:$0xf]
    %v149 = vld [vmem:[#allocation5 + $0x58] sm:$0xf]
    %v150 = vld [vmem:[#allocation5 + $0x5c] sm:$0xf]
    %v151 = vld [vmem:[#allocation5 + $0x60] sm:$0xf]
    %v152 = vld [vmem:[#allocation5 + $0x64] sm:$0xf]
    %v153 = vld [vmem:[#allocation5 + $0x68] sm:$0xf]
    %v154 = vld [vmem:[#allocation5 + $0x6c] sm:$0xf]
    %v155 = vld [vmem:[#allocation5 + $0x70] sm:$0xf]
    %v156 = vld [vmem:[#allocation5 + $0x74] sm:$0xf]
    %v157 = vld [vmem:[#allocation5 + $0x78] sm:$0xf]
    %v158 = vld [vmem:[#allocation5 + $0x7c] sm:$0xf]
    %v159 = vld [vmem:[#allocation5 + $0x80] sm:$0xf]
    %v160 = vld [vmem:[#allocation5 + $0x84] sm:$0xf]
    %v161 = vld [vmem:[#allocation5 + $0x88] sm:$0xf]
    %v162 = vld [vmem:[#allocation5 + $0x8c] sm:$0xf]
    %v163 = vld [vmem:[#allocation5 + $0x90] sm:$0xf]
    %v164 = vld [vmem:[#allocation5 + $0x94] sm:$0xf]
    %v165 = vld [vmem:[#allocation5 + $0x98] sm:$0xf]
    %v166 = vld [vmem:[#allocation5 + $0x9c] sm:$0xf]
    %v167 = vld [vmem:[#allocation5 + $0xa0] sm:$0xf]
    %v168 = vld [vmem:[#allocation5 + $0xa4] sm:$0xf]
    %v169 = vld [vmem:[#allocation5 + $0xa8] sm:$0xf]
    %v170 = vld [vmem:[#allocation5 + $0xac] sm:$0xf]
    %v171 = vld [vmem:[#allocation5 + $0xb0] sm:$0xf]
    %v172 = vld [vmem:[#allocation5 + $0xb4] sm:$0xf]
    %v173 = vld [vmem:[#allocation5 + $0xb8] sm:$0xf]
    %v174 = vld [vmem:[#allocation5 + $0xbc] sm:$0xf]
    %v175 = vld [vmem:[#allocation5 + $0xc0] sm:$0xf]
    %v176 = vld [vmem:[#allocation5 + $0xc4] sm:$0xf]
    %v177 = vld [vmem:[#allocation5 + $0xc8] sm:$0xf]
    %v178 = vld [vmem:[#allocation5 + $0xcc] sm:$0xf]
    %v179 = vld [vmem:[#allocation5 + $0xd0] sm:$0xf]
    %v180 = vld [vmem:[#allocation5 + $0xd4] sm:$0xf]
    %v181 = vld [vmem:[#allocation5 + $0xd8] sm:$0xf]
    %v182 = vld [vmem:[#allocation5 + $0xdc] sm:$0xf]
    %v183 = vld [vmem:[#allocation5 + $0xe0] sm:$0xf]
    %v184 = vld [vmem:[#allocation5 + $0xe4] sm:$0xf]
    %v185 = vld [vmem:[#allocation5 + $0xe8] sm:$0xf]
    %v186 = vld [vmem:[#allocation5 + $0xec] sm:$0xf]
    %v187 = vld [vmem:[#allocation5 + $0xf0] sm:$0xf]
    %v188 = vld [vmem:[#allocation5 + $0xf4] sm:$0xf]
    %v189 = vld [vmem:[#allocation5 + $0xf8] sm:$0xf]
    %v190 = vld [vmem:[#allocation5 + $0xfc] sm:$0xf]
    %v191 = vld [vmem:[%s2] sm:$0x1]
    %v193 = vlaneseq
    %v194 = vshrl.u32 %v193, 7
    %v195 = vsub.s32 0, %v194
    %v196 = vrot.slane %v191, %v195
    %v262 = vunpack.c.l.b16 %v63
    %v263 = vunpack.c.h.b16 %v63
    %v264 = vunpack.c.l.b16 %v64
    %v265 = vunpack.c.h.b16 %v64
    %v266 = vunpack.c.l.b16 %v65
    %v267 = vunpack.c.h.b16 %v65
    %v268 = vunpack.c.l.b16 %v66
    %v269 = vunpack.c.h.b16 %v66
    %v270 = vunpack.c.l.b16 %v67
    %v271 = vunpack.c.h.b16 %v67
    %v272 = vunpack.c.l.b16 %v68
    %v273 = vunpack.c.h.b16 %v68
    %v274 = vunpack.c.l.b16 %v69
    %v275 = vunpack.c.h.b16 %v69
    %v276 = vunpack.c.l.b16 %v70
    %v277 = vunpack.c.h.b16 %v70
    %v278 = vunpack.c.l.b16 %v71
    %v279 = vunpack.c.h.b16 %v71
    %v280 = vunpack.c.l.b16 %v72
    %v281 = vunpack.c.h.b16 %v72
    %v282 = vunpack.c.l.b16 %v73
    %v283 = vunpack.c.h.b16 %v73
    %v284 = vunpack.c.l.b16 %v74
    %v285 = vunpack.c.h.b16 %v74
    %v286 = vunpack.c.l.b16 %v75
    %v287 = vunpack.c.h.b16 %v75
    %v288 = vunpack.c.l.b16 %v76
    %v289 = vunpack.c.h.b16 %v76
    %v290 = vunpack.c.l.b16 %v77
    %v291 = vunpack.c.h.b16 %v77
    %v292 = vunpack.c.l.b16 %v78
    %v293 = vunpack.c.h.b16 %v78
    %v294 = vunpack.c.l.b16 %v79
    %v295 = vunpack.c.h.b16 %v79
    %v296 = vunpack.c.l.b16 %v80
    %v297 = vunpack.c.h.b16 %v80
    %v298 = vunpack.c.l.b16 %v81
    %v299 = vunpack.c.h.b16 %v81
    %v300 = vunpack.c.l.b16 %v82
    %v301 = vunpack.c.h.b16 %v82
    %v302 = vunpack.c.l.b16 %v83
    %v303 = vunpack.c.h.b16 %v83
    %v304 = vunpack.c.l.b16 %v84
    %v305 = vunpack.c.h.b16 %v84
    %v306 = vunpack.c.l.b16 %v85
    %v307 = vunpack.c.h.b16 %v85
    %v308 = vunpack.c.l.b16 %v86
    %v309 = vunpack.c.h.b16 %v86
    %v310 = vunpack.c.l.b16 %v87
    %v311 = vunpack.c.h.b16 %v87
    %v312 = vunpack.c.l.b16 %v88
    %v313 = vunpack.c.h.b16 %v88
    %v314 = vunpack.c.l.b16 %v89
    %v315 = vunpack.c.h.b16 %v89
    %v316 = vunpack.c.l.b16 %v90
    %v317 = vunpack.c.h.b16 %v90
    %v318 = vunpack.c.l.b16 %v91
    %v319 = vunpack.c.h.b16 %v91
    %v320 = vunpack.c.l.b16 %v92
    %v321 = vunpack.c.h.b16 %v92
    %v322 = vunpack.c.l.b16 %v93
    %v323 = vunpack.c.h.b16 %v93
    %v324 = vunpack.c.l.b16 %v94
    %v325 = vunpack.c.h.b16 %v94
    %v326 = vunpack.c.l.b16 %v95
    %v327 = vunpack.c.h.b16 %v95
    %v328 = vunpack.c.l.b16 %v96
    %v329 = vunpack.c.h.b16 %v96
    %v330 = vunpack.c.l.b16 %v97
    %v331 = vunpack.c.h.b16 %v97
    %v332 = vunpack.c.l.b16 %v98
    %v333 = vunpack.c.h.b16 %v98
    %v334 = vunpack.c.l.b16 %v99
    %v335 = vunpack.c.h.b16 %v99
    %v336 = vunpack.c.l.b16 %v100
    %v337 = vunpack.c.h.b16 %v100
    %v338 = vunpack.c.l.b16 %v101
    %v339 = vunpack.c.h.b16 %v101
    %v340 = vunpack.c.l.b16 %v102
    %v341 = vunpack.c.h.b16 %v102
    %v342 = vunpack.c.l.b16 %v103
    %v343 = vunpack.c.h.b16 %v103
    %v344 = vunpack.c.l.b16 %v104
    %v345 = vunpack.c.h.b16 %v104
    %v346 = vunpack.c.l.b16 %v105
    %v347 = vunpack.c.h.b16 %v105
    %v348 = vunpack.c.l.b16 %v106
    %v349 = vunpack.c.h.b16 %v106
    %v350 = vunpack.c.l.b16 %v107
    %v351 = vunpack.c.h.b16 %v107
    %v352 = vunpack.c.l.b16 %v108
    %v353 = vunpack.c.h.b16 %v108
    %v354 = vunpack.c.l.b16 %v109
    %v355 = vunpack.c.h.b16 %v109
    %v356 = vunpack.c.l.b16 %v110
    %v357 = vunpack.c.h.b16 %v110
    %v358 = vunpack.c.l.b16 %v111
    %v359 = vunpack.c.h.b16 %v111
    %v360 = vunpack.c.l.b16 %v112
    %v361 = vunpack.c.h.b16 %v112
    %v362 = vunpack.c.l.b16 %v113
    %v363 = vunpack.c.h.b16 %v113
    %v364 = vunpack.c.l.b16 %v114
    %v365 = vunpack.c.h.b16 %v114
    %v366 = vunpack.c.l.b16 %v115
    %v367 = vunpack.c.h.b16 %v115
    %v368 = vunpack.c.l.b16 %v116
    %v369 = vunpack.c.h.b16 %v116
    %v370 = vunpack.c.l.b16 %v117
    %v371 = vunpack.c.h.b16 %v117
    %v372 = vunpack.c.l.b16 %v118
    %v373 = vunpack.c.h.b16 %v118
    %v374 = vunpack.c.l.b16 %v119
    %v375 = vunpack.c.h.b16 %v119
    %v376 = vunpack.c.l.b16 %v120
    %v377 = vunpack.c.h.b16 %v120
    %v378 = vunpack.c.l.b16 %v121
    %v379 = vunpack.c.h.b16 %v121
    %v380 = vunpack.c.l.b16 %v122
    %v381 = vunpack.c.h.b16 %v122
    %v382 = vunpack.c.l.b16 %v123
    %v383 = vunpack.c.h.b16 %v123
    %v384 = vunpack.c.l.b16 %v124
    %v385 = vunpack.c.h.b16 %v124
    %v386 = vunpack.c.l.b16 %v125
    %v387 = vunpack.c.h.b16 %v125
    %v388 = vunpack.c.l.b16 %v126
    %v389 = vunpack.c.h.b16 %v126
    %v390 = vpack.c.b16 %v266, %v262
    %v391 = vpack.c.b16 %v267, %v263
    %v392 = vpack.c.b16 %v268, %v264
    %v393 = vpack.c.b16 %v269, %v265
    %v394 = vpack.c.b16 %v274, %v270
    %v395 = vpack.c.b16 %v275, %v271
    %v396 = vpack.c.b16 %v276, %v272
    %v397 = vpack.c.b16 %v277, %v273
    %v398 = vpack.c.b16 %v282, %v278
    %v399 = vpack.c.b16 %v283, %v279
    %v400 = vpack.c.b16 %v284, %v280
    %v401 = vpack.c.b16 %v285, %v281
    %v402 = vpack.c.b16 %v290, %v286
    %v403 = vpack.c.b16 %v291, %v287
    %v404 = vpack.c.b16 %v292, %v288
    %v405 = vpack.c.b16 %v293, %v289
    %v406 = vpack.c.b16 %v298, %v294
    %v407 = vpack.c.b16 %v299, %v295
    %v408 = vpack.c.b16 %v300, %v296
    %v409 = vpack.c.b16 %v301, %v297
    %v410 = vpack.c.b16 %v306, %v302
    %v411 = vpack.c.b16 %v307, %v303
    %v412 = vpack.c.b16 %v308, %v304
    %v413 = vpack.c.b16 %v309, %v305
    %v414 = vpack.c.b16 %v314, %v310
    %v415 = vpack.c.b16 %v315, %v311
    %v416 = vpack.c.b16 %v316, %v312
    %v417 = vpack.c.b16 %v317, %v313
    %v418 = vpack.c.b16 %v322, %v318
    %v419 = vpack.c.b16 %v323, %v319
    %v420 = vpack.c.b16 %v324, %v320
    %v421 = vpack.c.b16 %v325, %v321
    %v422 = vpack.c.b16 %v330, %v326
    %v423 = vpack.c.b16 %v331, %v327
    %v424 = vpack.c.b16 %v332, %v328
    %v425 = vpack.c.b16 %v333, %v329
    %v426 = vpack.c.b16 %v338, %v334
    %v427 = vpack.c.b16 %v339, %v335
    %v428 = vpack.c.b16 %v340, %v336
    %v429 = vpack.c.b16 %v341, %v337
    %v430 = vpack.c.b16 %v346, %v342
    %v431 = vpack.c.b16 %v347, %v343
    %v432 = vpack.c.b16 %v348, %v344
    %v433 = vpack.c.b16 %v349, %v345
    %v434 = vpack.c.b16 %v354, %v350
    %v435 = vpack.c.b16 %v355, %v351
    %v436 = vpack.c.b16 %v356, %v352
    %v437 = vpack.c.b16 %v357, %v353
    %v438 = vpack.c.b16 %v362, %v358
    %v439 = vpack.c.b16 %v363, %v359
    %v440 = vpack.c.b16 %v364, %v360
    %v441 = vpack.c.b16 %v365, %v361
    %v442 = vpack.c.b16 %v370, %v366
    %v443 = vpack.c.b16 %v371, %v367
    %v444 = vpack.c.b16 %v372, %v368
    %v445 = vpack.c.b16 %v373, %v369
    %v446 = vpack.c.b16 %v378, %v374
    %v447 = vpack.c.b16 %v379, %v375
    %v448 = vpack.c.b16 %v380, %v376
    %v449 = vpack.c.b16 %v381, %v377
    %v450 = vpack.c.b16 %v386, %v382
    %v451 = vpack.c.b16 %v387, %v383
    %v452 = vpack.c.b16 %v388, %v384
    %v453 = vpack.c.b16 %v389, %v385
    %v582 = vunpack.c.l.b16 %v127
    %v583 = vunpack.c.l.b16 %v128
    %v584 = vunpack.c.l.b16 %v129
    %v585 = vunpack.c.l.b16 %v130
    %v586 = vunpack.c.l.b16 %v131
    %v587 = vunpack.c.l.b16 %v132
    %v588 = vunpack.c.l.b16 %v133
    %v589 = vunpack.c.l.b16 %v134
    %v590 = vunpack.c.l.b16 %v135
    %v591 = vunpack.c.l.b16 %v136
    %v592 = vunpack.c.l.b16 %v137
    %v593 = vunpack.c.l.b16 %v138
    %v594 = vunpack.c.l.b16 %v139
    %v595 = vunpack.c.l.b16 %v140
    %v596 = vunpack.c.l.b16 %v141
    %v597 = vunpack.c.l.b16 %v142
    %v598 = vunpack.c.l.b16 %v143
    %v599 = vunpack.c.l.b16 %v144
    %v600 = vunpack.c.l.b16 %v145
    %v601 = vunpack.c.l.b16 %v146
    %v602 = vunpack.c.l.b16 %v147
    %v603 = vunpack.c.l.b16 %v148
    %v604 = vunpack.c.l.b16 %v149
    %v605 = vunpack.c.l.b16 %v150
    %v606 = vunpack.c.l.b16 %v151
    %v607 = vunpack.c.l.b16 %v152
    %v608 = vunpack.c.l.b16 %v153
    %v609 = vunpack.c.l.b16 %v154
    %v610 = vunpack.c.l.b16 %v155
    %v611 = vunpack.c.l.b16 %v156
    %v612 = vunpack.c.l.b16 %v157
    %v613 = vunpack.c.l.b16 %v158
    %v614 = vunpack.c.l.b16 %v159
    %v615 = vunpack.c.l.b16 %v160
    %v616 = vunpack.c.l.b16 %v161
    %v617 = vunpack.c.l.b16 %v162
    %v618 = vunpack.c.l.b16 %v163
    %v619 = vunpack.c.l.b16 %v164
    %v620 = vunpack.c.l.b16 %v165
    %v621 = vunpack.c.l.b16 %v166
    %v622 = vunpack.c.l.b16 %v167
    %v623 = vunpack.c.l.b16 %v168
    %v624 = vunpack.c.l.b16 %v169
    %v625 = vunpack.c.l.b16 %v170
    %v626 = vunpack.c.l.b16 %v171
    %v627 = vunpack.c.l.b16 %v172
    %v628 = vunpack.c.l.b16 %v173
    %v629 = vunpack.c.l.b16 %v174
    %v630 = vunpack.c.l.b16 %v175
    %v631 = vunpack.c.l.b16 %v176
    %v632 = vunpack.c.l.b16 %v177
    %v633 = vunpack.c.l.b16 %v178
    %v634 = vunpack.c.l.b16 %v179
    %v635 = vunpack.c.l.b16 %v180
    %v636 = vunpack.c.l.b16 %v181
    %v637 = vunpack.c.l.b16 %v182
    %v638 = vunpack.c.l.b16 %v183
    %v639 = vunpack.c.l.b16 %v184
    %v640 = vunpack.c.l.b16 %v185
    %v641 = vunpack.c.l.b16 %v186
    %v642 = vunpack.c.l.b16 %v187
    %v643 = vunpack.c.l.b16 %v188
    %v644 = vunpack.c.l.b16 %v189
    %v645 = vunpack.c.l.b16 %v190
    %v646 = vpack.c.b16 %v583, %v582
    %v647 = vpack.c.b16 %v585, %v584
    %v648 = vpack.c.b16 %v587, %v586
    %v649 = vpack.c.b16 %v589, %v588
    %v650 = vpack.c.b16 %v591, %v590
    %v651 = vpack.c.b16 %v593, %v592
    %v652 = vpack.c.b16 %v595, %v594
    %v653 = vpack.c.b16 %v597, %v596
    %v654 = vpack.c.b16 %v599, %v598
    %v655 = vpack.c.b16 %v601, %v600
    %v656 = vpack.c.b16 %v603, %v602
    %v657 = vpack.c.b16 %v605, %v604
    %v658 = vpack.c.b16 %v607, %v606
    %v659 = vpack.c.b16 %v609, %v608
    %v660 = vpack.c.b16 %v611, %v610
    %v661 = vpack.c.b16 %v613, %v612
    %v662 = vpack.c.b16 %v615, %v614
    %v663 = vpack.c.b16 %v617, %v616
    %v664 = vpack.c.b16 %v619, %v618
    %v665 = vpack.c.b16 %v621, %v620
    %v666 = vpack.c.b16 %v623, %v622
    %v667 = vpack.c.b16 %v625, %v624
    %v668 = vpack.c.b16 %v627, %v626
    %v669 = vpack.c.b16 %v629, %v628
    %v670 = vpack.c.b16 %v631, %v630
    %v671 = vpack.c.b16 %v633, %v632
    %v672 = vpack.c.b16 %v635, %v634
    %v673 = vpack.c.b16 %v637, %v636
    %v674 = vpack.c.b16 %v639, %v638
    %v675 = vpack.c.b16 %v641, %v640
    %v676 = vpack.c.b16 %v643, %v642
    %v677 = vpack.c.b16 %v645, %v644
    %710 = vmatprep.subr.bf16.mxu0 0
    %711 = vmatpush1.bf16.msra.mxu0 %v646
    %712 = vmatprep.subr.bf16.mxu0 0
    %713 = vmatpush1.bf16.msra.mxu0 %v647
    %714 = vmatprep.subr.bf16.mxu0 0
    %715 = vmatpush1.bf16.msra.mxu0 %v648
    %716 = vmatprep.subr.bf16.mxu0 0
    %717 = vmatpush1.bf16.msra.mxu0 %v649
    %718 = vmatprep.subr.bf16.mxu0 0
    %719 = vmatpush1.bf16.msra.mxu0 %v650
    %720 = vmatprep.subr.bf16.mxu0 0
    %721 = vmatpush1.bf16.msra.mxu0 %v651
    %722 = vmatprep.subr.bf16.mxu0 0
    %723 = vmatpush1.bf16.msra.mxu0 %v652
    %724 = vmatprep.subr.bf16.mxu0 0
    %725 = vmatpush1.bf16.msra.mxu0 %v653
    %726 = vmatprep.subr.bf16.mxu0 0
    %727 = vmatpush1.bf16.msra.mxu0 %v654
    %728 = vmatprep.subr.bf16.mxu0 0
    %729 = vmatpush1.bf16.msra.mxu0 %v655
    %730 = vmatprep.subr.bf16.mxu0 0
    %731 = vmatpush1.bf16.msra.mxu0 %v656
    %732 = vmatprep.subr.bf16.mxu0 0
    %733 = vmatpush1.bf16.msra.mxu0 %v657
    %734 = vmatprep.subr.bf16.mxu0 0
    %735 = vmatpush1.bf16.msra.mxu0 %v658
    %736 = vmatprep.subr.bf16.mxu0 0
    %737 = vmatpush1.bf16.msra.mxu0 %v659
    %738 = vmatprep.subr.bf16.mxu0 0
    %739 = vmatpush1.bf16.msra.mxu0 %v660
    %740 = vmatprep.subr.bf16.mxu0 0
    %741 = vmatpush1.bf16.msra.mxu0 %v661
    %742 = vmatprep.mubr.bf16.mxu0 %v391
    %743 = vmatmul.mubr.bf16.gmra.mrb[0].mxu0 %v390
    %v744 = vpop.f32.mrb[0].mxu0
    %v745 = vadd.f32 %v196, %v744
    %v746 = vpop.f32.mrb[0].mxu0
    %v747 = vpop.f32.mrb[0].mxu0
    %v748 = vadd.f32 %v196, %v747
    %v749 = vpop.f32.mrb[0].mxu0
    %750 = vmatprep.mubr.bf16.mxu0 %v395
    %751 = vmatmul.mubr.bf16.gmra.mrb[0].mxu0 %v394
    %v752 = vpop.f32.mrb[0].mxu0
    %v753 = vadd.f32 %v196, %v752
    %v754 = vpop.f32.mrb[0].mxu0
    %v755 = vpop.f32.mrb[0].mxu0
    %v756 = vadd.f32 %v196, %v755
    %v757 = vpop.f32.mrb[0].mxu0
    %758 = vmatprep.mubr.bf16.mxu0 %v399
    %759 = vmatmul.mubr.bf16.gmra.mrb[0].mxu0 %v398
    %v760 = vpop.f32.mrb[0].mxu0
    %v761 = vadd.f32 %v196, %v760
    %v762 = vpop.f32.mrb[0].mxu0
    %v763 = vpop.f32.mrb[0].mxu0
    %v764 = vadd.f32 %v196, %v763
    %v765 = vpop.f32.mrb[0].mxu0
    %766 = vmatprep.mubr.bf16.mxu0 %v403
    %767 = vmatmul.mubr.bf16.gmra.mrb[0].mxu0 %v402
    %v768 = vpop.f32.mrb[0].mxu0
    %v769 = vadd.f32 %v196, %v768
    %v770 = vpop.f32.mrb[0].mxu0
    %v771 = vpop.f32.mrb[0].mxu0
    %v772 = vadd.f32 %v196, %v771
    %v773 = vpop.f32.mrb[0].mxu0
    %774 = vmatprep.mubr.bf16.mxu0 %v407
    %775 = vmatmul.mubr.bf16.gmra.mrb[0].mxu0 %v406
    %v776 = vpop.f32.mrb[0].mxu0
    %v777 = vadd.f32 %v196, %v776
    %v778 = vpop.f32.mrb[0].mxu0
    %v779 = vpop.f32.mrb[0].mxu0
    %v780 = vadd.f32 %v196, %v779
    %v781 = vpop.f32.mrb[0].mxu0
    %782 = vmatprep.mubr.bf16.mxu0 %v411
    %783 = vmatmul.mubr.bf16.gmra.mrb[0].mxu0 %v410
    %v784 = vpop.f32.mrb[0].mxu0
    %v785 = vadd.f32 %v196, %v784
    %v786 = vpop.f32.mrb[0].mxu0
    %v787 = vpop.f32.mrb[0].mxu0
    %v788 = vadd.f32 %v196, %v787
    %v789 = vpop.f32.mrb[0].mxu0
    %790 = vmatprep.mubr.bf16.mxu0 %v415
    %791 = vmatmul.mubr.bf16.gmra.mrb[0].mxu0 %v414
    %v792 = vpop.f32.mrb[0].mxu0
    %v793 = vadd.f32 %v196, %v792
    %v794 = vpop.f32.mrb[0].mxu0
    %v795 = vpop.f32.mrb[0].mxu0
    %v796 = vadd.f32 %v196, %v795
    %v797 = vpop.f32.mrb[0].mxu0
    %798 = vmatprep.mubr.bf16.mxu0 %v419
    %799 = vmatmul.mubr.bf16.gmra.mrb[0].mxu0 %v418
    %v800 = vpop.f32.mrb[0].mxu0
    %v801 = vadd.f32 %v196, %v800
    %v802 = vpop.f32.mrb[0].mxu0
    %v803 = vpop.f32.mrb[0].mxu0
    %v804 = vadd.f32 %v196, %v803
    %v805 = vpop.f32.mrb[0].mxu0
    %806 = vmatprep.mubr.bf16.mxu0 %v423
    %807 = vmatmul.mubr.bf16.gmra.mrb[0].mxu0 %v422
    %v808 = vpop.f32.mrb[0].mxu0
    %v809 = vadd.f32 %v196, %v808
    %v810 = vpop.f32.mrb[0].mxu0
    %v811 = vpop.f32.mrb[0].mxu0
    %v812 = vadd.f32 %v196, %v811
    %v813 = vpop.f32.mrb[0].mxu0
    %814 = vmatprep.mubr.bf16.mxu0 %v427
    %815 = vmatmul.mubr.bf16.gmra.mrb[0].mxu0 %v426
    %v816 = vpop.f32.mrb[0].mxu0
    %v817 = vadd.f32 %v196, %v816
    %v818 = vpop.f32.mrb[0].mxu0
    %v819 = vpop.f32.mrb[0].mxu0
    %v820 = vadd.f32 %v196, %v819
    %v821 = vpop.f32.mrb[0].mxu0
    %822 = vmatprep.mubr.bf16.mxu0 %v431
    %823 = vmatmul.mubr.bf16.gmra.mrb[0].mxu0 %v430
    %v824 = vpop.f32.mrb[0].mxu0
    %v825 = vadd.f32 %v196, %v824
    %v826 = vpop.f32.mrb[0].mxu0
    %v827 = vpop.f32.mrb[0].mxu0
    %v828 = vadd.f32 %v196, %v827
    %v829 = vpop.f32.mrb[0].mxu0
    %830 = vmatprep.mubr.bf16.mxu0 %v435
    %831 = vmatmul.mubr.bf16.gmra.mrb[0].mxu0 %v434
    %v832 = vpop.f32.mrb[0].mxu0
    %v833 = vadd.f32 %v196, %v832
    %v834 = vpop.f32.mrb[0].mxu0
    %v835 = vpop.f32.mrb[0].mxu0
    %v836 = vadd.f32 %v196, %v835
    %v837 = vpop.f32.mrb[0].mxu0
    %838 = vmatprep.mubr.bf16.mxu0 %v439
    %839 = vmatmul.mubr.bf16.gmra.mrb[0].mxu0 %v438
    %v840 = vpop.f32.mrb[0].mxu0
    %v841 = vadd.f32 %v196, %v840
    %v842 = vpop.f32.mrb[0].mxu0
    %v843 = vpop.f32.mrb[0].mxu0
    %v844 = vadd.f32 %v196, %v843
    %v845 = vpop.f32.mrb[0].mxu0
    %846 = vmatprep.mubr.bf16.mxu0 %v443
    %847 = vmatmul.mubr.bf16.gmra.mrb[0].mxu0 %v442
    %v848 = vpop.f32.mrb[0].mxu0
    %v849 = vadd.f32 %v196, %v848
    %v850 = vpop.f32.mrb[0].mxu0
    %v851 = vpop.f32.mrb[0].mxu0
    %v852 = vadd.f32 %v196, %v851
    %v853 = vpop.f32.mrb[0].mxu0
    %854 = vmatprep.mubr.bf16.mxu0 %v447
    %855 = vmatmul.mubr.bf16.gmra.mrb[0].mxu0 %v446
    %v856 = vpop.f32.mrb[0].mxu0
    %v857 = vadd.f32 %v196, %v856
    %v858 = vpop.f32.mrb[0].mxu0
    %v859 = vpop.f32.mrb[0].mxu0
    %v860 = vadd.f32 %v196, %v859
    %v861 = vpop.f32.mrb[0].mxu0
    %862 = vmatprep.mubr.bf16.mxu0 %v451
    %863 = vmatmul.mubr.bf16.gmra.mrb[0].mxu0 %v450
    %v864 = vpop.f32.mrb[0].mxu0
    %v865 = vadd.f32 %v196, %v864
    %v866 = vpop.f32.mrb[0].mxu0
    %v867 = vpop.f32.mrb[0].mxu0
    %v868 = vadd.f32 %v196, %v867
    %v869 = vpop.f32.mrb[0].mxu0
    %870 = vdwg.mxu0
    %871 = vmatprep.subr.bf16.mxu0 0
    %872 = vmatpush1.bf16.msra.mxu0 %v662
    %873 = vmatprep.subr.bf16.mxu0 0
    %874 = vmatpush1.bf16.msra.mxu0 %v663
    %875 = vmatprep.subr.bf16.mxu0 0
    %876 = vmatpush1.bf16.msra.mxu0 %v664
    %877 = vmatprep.subr.bf16.mxu0 0
    %878 = vmatpush1.bf16.msra.mxu0 %v665
    %879 = vmatprep.subr.bf16.mxu0 0
    %880 = vmatpush1.bf16.msra.mxu0 %v666
    %881 = vmatprep.subr.bf16.mxu0 0
    %882 = vmatpush1.bf16.msra.mxu0 %v667
    %883 = vmatprep.subr.bf16.mxu0 0
    %884 = vmatpush1.bf16.msra.mxu0 %v668
    %885 = vmatprep.subr.bf16.mxu0 0
    %886 = vmatpush1.bf16.msra.mxu0 %v669
    %887 = vmatprep.subr.bf16.mxu0 0
    %888 = vmatpush1.bf16.msra.mxu0 %v670
    %889 = vmatprep.subr.bf16.mxu0 0
    %890 = vmatpush1.bf16.msra.mxu0 %v671
    %891 = vmatprep.subr.bf16.mxu0 0
    %892 = vmatpush1.bf16.msra.mxu0 %v672
    %893 = vmatprep.subr.bf16.mxu0 0
    %894 = vmatpush1.bf16.msra.mxu0 %v673
    %895 = vmatprep.subr.bf16.mxu0 0
    %896 = vmatpush1.bf16.msra.mxu0 %v674
    %897 = vmatprep.subr.bf16.mxu0 0
    %898 = vmatpush1.bf16.msra.mxu0 %v675
    %899 = vmatprep.subr.bf16.mxu0 0
    %900 = vmatpush1.bf16.msra.mxu0 %v676
    %901 = vmatprep.subr.bf16.mxu0 0
    %902 = vmatpush1.bf16.msra.mxu0 %v677
    %903 = vmatprep.mubr.bf16.mxu0 %v393
    %904 = vmatmul.mubr.bf16.gmra.mrb[0].mxu0 %v392
    %v905 = vpop.f32.mrb[0].mxu0
    %v906 = vadd.f32 %v745, %v905
    %v907 = vpop.f32.mrb[0].mxu0
    %v908 = vpop.f32.mrb[0].mxu0
    %v909 = vadd.f32 %v748, %v908
    %v910 = vpop.f32.mrb[0].mxu0
    %911 = vmatprep.mubr.bf16.mxu0 %v397
    %912 = vmatmul.mubr.bf16.gmra.mrb[0].mxu0 %v396
    %v913 = vpop.f32.mrb[0].mxu0
    %v914 = vadd.f32 %v753, %v913
    %v915 = vpop.f32.mrb[0].mxu0
    %v916 = vpop.f32.mrb[0].mxu0
    %v917 = vadd.f32 %v756, %v916
    %v918 = vpop.f32.mrb[0].mxu0
    %919 = vmatprep.mubr.bf16.mxu0 %v401
    %920 = vmatmul.mubr.bf16.gmra.mrb[0].mxu0 %v400
    %v921 = vpop.f32.mrb[0].mxu0
    %v922 = vadd.f32 %v761, %v921
    %v923 = vpop.f32.mrb[0].mxu0
    %v924 = vpop.f32.mrb[0].mxu0
    %v925 = vadd.f32 %v764, %v924
    %v926 = vpop.f32.mrb[0].mxu0
    %927 = vmatprep.mubr.bf16.mxu0 %v405
    %928 = vmatmul.mubr.bf16.gmra.mrb[0].mxu0 %v404
    %v929 = vpop.f32.mrb[0].mxu0
    %v930 = vadd.f32 %v769, %v929
    %v931 = vpop.f32.mrb[0].mxu0
    %v932 = vpop.f32.mrb[0].mxu0
    %v933 = vadd.f32 %v772, %v932
    %v934 = vpop.f32.mrb[0].mxu0
    %935 = vmatprep.mubr.bf16.mxu0 %v409
    %936 = vmatmul.mubr.bf16.gmra.mrb[0].mxu0 %v408
    %v937 = vpop.f32.mrb[0].mxu0
    %v938 = vadd.f32 %v777, %v937
    %v939 = vpop.f32.mrb[0].mxu0
    %v940 = vpop.f32.mrb[0].mxu0
    %v941 = vadd.f32 %v780, %v940
    %v942 = vpop.f32.mrb[0].mxu0
    %943 = vmatprep.mubr.bf16.mxu0 %v413
    %944 = vmatmul.mubr.bf16.gmra.mrb[0].mxu0 %v412
    %v945 = vpop.f32.mrb[0].mxu0
    %v946 = vadd.f32 %v785, %v945
    %v947 = vpop.f32.mrb[0].mxu0
    %v948 = vpop.f32.mrb[0].mxu0
    %v949 = vadd.f32 %v788, %v948
    %v950 = vpop.f32.mrb[0].mxu0
    %951 = vmatprep.mubr.bf16.mxu0 %v417
    %952 = vmatmul.mubr.bf16.gmra.mrb[0].mxu0 %v416
    %v953 = vpop.f32.mrb[0].mxu0
    %v954 = vadd.f32 %v793, %v953
    %v955 = vpop.f32.mrb[0].mxu0
    %v956 = vpop.f32.mrb[0].mxu0
    %v957 = vadd.f32 %v796, %v956
    %v958 = vpop.f32.mrb[0].mxu0
    %959 = vmatprep.mubr.bf16.mxu0 %v421
    %960 = vmatmul.mubr.bf16.gmra.mrb[0].mxu0 %v420
    %v961 = vpop.f32.mrb[0].mxu0
    %v962 = vadd.f32 %v801, %v961
    %v963 = vpop.f32.mrb[0].mxu0
    %v964 = vpop.f32.mrb[0].mxu0
    %v965 = vadd.f32 %v804, %v964
    %v966 = vpop.f32.mrb[0].mxu0
    %967 = vmatprep.mubr.bf16.mxu0 %v425
    %968 = vmatmul.mubr.bf16.gmra.mrb[0].mxu0 %v424
    %v969 = vpop.f32.mrb[0].mxu0
    %v970 = vadd.f32 %v809, %v969
    %v971 = vpop.f32.mrb[0].mxu0
    %v972 = vpop.f32.mrb[0].mxu0
    %v973 = vadd.f32 %v812, %v972
    %v974 = vpop.f32.mrb[0].mxu0
    %975 = vmatprep.mubr.bf16.mxu0 %v429
    %976 = vmatmul.mubr.bf16.gmra.mrb[0].mxu0 %v428
    %v977 = vpop.f32.mrb[0].mxu0
    %v978 = vadd.f32 %v817, %v977
    %v979 = vpop.f32.mrb[0].mxu0
    %v980 = vpop.f32.mrb[0].mxu0
    %v981 = vadd.f32 %v820, %v980
    %v982 = vpop.f32.mrb[0].mxu0
    %983 = vmatprep.mubr.bf16.mxu0 %v433
    %984 = vmatmul.mubr.bf16.gmra.mrb[0].mxu0 %v432
    %v985 = vpop.f32.mrb[0].mxu0
    %v986 = vadd.f32 %v825, %v985
    %v987 = vpop.f32.mrb[0].mxu0
    %v988 = vpop.f32.mrb[0].mxu0
    %v989 = vadd.f32 %v828, %v988
    %v990 = vpop.f32.mrb[0].mxu0
    %991 = vmatprep.mubr.bf16.mxu0 %v437
    %992 = vmatmul.mubr.bf16.gmra.mrb[0].mxu0 %v436
    %v993 = vpop.f32.mrb[0].mxu0
    %v994 = vadd.f32 %v833, %v993
    %v995 = vpop.f32.mrb[0].mxu0
    %v996 = vpop.f32.mrb[0].mxu0
    %v997 = vadd.f32 %v836, %v996
    %v998 = vpop.f32.mrb[0].mxu0
    %999 = vmatprep.mubr.bf16.mxu0 %v441
    %1000 = vmatmul.mubr.bf16.gmra.mrb[0].mxu0 %v440
    %v1001 = vpop.f32.mrb[0].mxu0
    %v1002 = vadd.f32 %v841, %v1001
    %v1003 = vpop.f32.mrb[0].mxu0
    %v1004 = vpop.f32.mrb[0].mxu0
    %v1005 = vadd.f32 %v844, %v1004
    %v1006 = vpop.f32.mrb[0].mxu0
    %1007 = vmatprep.mubr.bf16.mxu0 %v445
    %1008 = vmatmul.mubr.bf16.gmra.mrb[0].mxu0 %v444
    %v1009 = vpop.f32.mrb[0].mxu0
    %v1010 = vadd.f32 %v849, %v1009
    %v1011 = vpop.f32.mrb[0].mxu0
    %v1012 = vpop.f32.mrb[0].mxu0
    %v1013 = vadd.f32 %v852, %v1012
    %v1014 = vpop.f32.mrb[0].mxu0
    %1015 = vmatprep.mubr.bf16.mxu0 %v449
    %1016 = vmatmul.mubr.bf16.gmra.mrb[0].mxu0 %v448
    %v1017 = vpop.f32.mrb[0].mxu0
    %v1018 = vadd.f32 %v857, %v1017
    %v1019 = vpop.f32.mrb[0].mxu0
    %v1020 = vpop.f32.mrb[0].mxu0
    %v1021 = vadd.f32 %v860, %v1020
    %v1022 = vpop.f32.mrb[0].mxu0
    %1023 = vmatprep.mubr.bf16.mxu0 %v453
    %1024 = vmatmul.mubr.bf16.gmra.mrb[0].mxu0 %v452
    %v1025 = vpop.f32.mrb[0].mxu0
    %v1026 = vadd.f32 %v865, %v1025
    %v1027 = vpop.f32.mrb[0].mxu0
    %v1028 = vpop.f32.mrb[0].mxu0
    %v1029 = vadd.f32 %v868, %v1028
    %v1030 = vpop.f32.mrb[0].mxu0
    %1031 = vdwg.mxu0
    %v1032 = vmax.f32 %v906, 0.0
    %v1033 = vmax.f32 %v909, 0.0
    %v1034 = vmax.f32 %v914, 0.0
    %v1035 = vmax.f32 %v917, 0.0
    %v1036 = vmax.f32 %v922, 0.0
    %v1037 = vmax.f32 %v925, 0.0
    %v1038 = vmax.f32 %v930, 0.0
    %v1039 = vmax.f32 %v933, 0.0
    %v1040 = vmax.f32 %v938, 0.0
    %v1041 = vmax.f32 %v941, 0.0
    %v1042 = vmax.f32 %v946, 0.0
    %v1043 = vmax.f32 %v949, 0.0
    %v1044 = vmax.f32 %v954, 0.0
    %v1045 = vmax.f32 %v957, 0.0
    %v1046 = vmax.f32 %v962, 0.0
    %v1047 = vmax.f32 %v965, 0.0
    %v1048 = vmax.f32 %v970, 0.0
    %v1049 = vmax.f32 %v973, 0.0
    %v1050 = vmax.f32 %v978, 0.0
    %v1051 = vmax.f32 %v981, 0.0
    %v1052 = vmax.f32 %v986, 0.0
    %v1053 = vmax.f32 %v989, 0.0
    %v1054 = vmax.f32 %v994, 0.0
    %v1055 = vmax.f32 %v997, 0.0
    %v1056 = vmax.f32 %v1002, 0.0
    %v1057 = vmax.f32 %v1005, 0.0
    %v1058 = vmax.f32 %v1010, 0.0
    %v1059 = vmax.f32 %v1013, 0.0
    %v1060 = vmax.f32 %v1018, 0.0
    %v1061 = vmax.f32 %v1021, 0.0
    %v1062 = vmax.f32 %v1026, 0.0
    %v1063 = vmax.f32 %v1029, 0.0
    %v1072 = vrot.slane %v1036, 7
    %vm1073 = vcmask 1041409
    %v1074 = vsel %vm1073, %v1072, %v1032
    %v1075 = vrot.slane %v1040, 6
    %vm1076 = vcmask 1042434
    %v1077 = vsel %vm1076, %v1075, %v1074
    %v1078 = vrot.slane %v1044, 5
    %vm1079 = vcmask 1043459
    %v1080 = vsel %vm1079, %v1078, %v1077
    %v1081 = vrot.slane %v1048, 4
    %vm1082 = vcmask 1044484
    %v1083 = vsel %vm1082, %v1081, %v1080
    %v1084 = vrot.slane %v1052, 3
    %vm1085 = vcmask 1045509
    %v1086 = vsel %vm1085, %v1084, %v1083
    %v1087 = vrot.slane %v1056, 2
    %vm1088 = vcmask 1046534
    %v1089 = vsel %vm1088, %v1087, %v1086
    %v1090 = vrot.slane %v1060, 1
    %vm1091 = vcmask 1047559
    %v1092 = vsel %vm1091, %v1090, %v1089
    %v1094 = vrot.slane %v1032, 1
    %v1095 = vsel %vm1073, %v1036, %v1094
    %v1096 = vrot.slane %v1040, 7
    %v1097 = vsel %vm1076, %v1096, %v1095
    %v1098 = vrot.slane %v1044, 6
    %v1099 = vsel %vm1079, %v1098, %v1097
    %v1100 = vrot.slane %v1048, 5
    %v1101 = vsel %vm1082, %v1100, %v1099
    %v1102 = vrot.slane %v1052, 4
    %v1103 = vsel %vm1085, %v1102, %v1101
    %v1104 = vrot.slane %v1056, 3
    %v1105 = vsel %vm1088, %v1104, %v1103
    %v1106 = vrot.slane %v1060, 2
    %v1107 = vsel %vm1091, %v1106, %v1105
    %v1109 = vrot.slane %v1032, 2
    %v1110 = vrot.slane %v1036, 1
    %v1111 = vsel %vm1073, %v1110, %v1109
    %v1112 = vsel %vm1076, %v1040, %v1111
    %v1113 = vrot.slane %v1044, 7
    %v1114 = vsel %vm1079, %v1113, %v1112
    %v1115 = vrot.slane %v1048, 6
    %v1116 = vsel %vm1082, %v1115, %v1114
    %v1117 = vrot.slane %v1052, 5
    %v1118 = vsel %vm1085, %v1117, %v1116
    %v1119 = vrot.slane %v1056, 4
    %v1120 = vsel %vm1088, %v1119, %v1118
    %v1121 = vrot.slane %v1060, 3
    %v1122 = vsel %vm1091, %v1121, %v1120
    %v1124 = vrot.slane %v1032, 3
    %v1125 = vrot.slane %v1036, 2
    %v1126 = vsel %vm1073, %v1125, %v1124
    %v1127 = vrot.slane %v1040, 1
    %v1128 = vsel %vm1076, %v1127, %v1126
    %v1129 = vsel %vm1079, %v1044, %v1128
    %v1130 = vrot.slane %v1048, 7
    %v1131 = vsel %vm1082, %v1130, %v1129
    %v1132 = vrot.slane %v1052, 6
    %v1133 = vsel %vm1085, %v1132, %v1131
    %v1134 = vrot.slane %v1056, 5
    %v1135 = vsel %vm1088, %v1134, %v1133
    %v1136 = vrot.slane %v1060, 4
    %v1137 = vsel %vm1091, %v1136, %v1135
    %v1139 = vrot.slane %v1032, 4
    %v1140 = vrot.slane %v1036, 3
    %v1141 = vsel %vm1073, %v1140, %v1139
    %v1142 = vrot.slane %v1040, 2
    %v1143 = vsel %vm1076, %v1142, %v1141
    %v1144 = vrot.slane %v1044, 1
    %v1145 = vsel %vm1079, %v1144, %v1143
    %v1146 = vsel %vm1082, %v1048, %v1145
    %v1147 = vrot.slane %v1052, 7
    %v1148 = vsel %vm1085, %v1147, %v1146
    %v1149 = vrot.slane %v1056, 6
    %v1150 = vsel %vm1088, %v1149, %v1148
    %v1151 = vrot.slane %v1060, 5
    %v1152 = vsel %vm1091, %v1151, %v1150
    %v1154 = vrot.slane %v1032, 5
    %v1155 = vrot.slane %v1036, 4
    %v1156 = vsel %vm1073, %v1155, %v1154
    %v1157 = vrot.slane %v1040, 3
    %v1158 = vsel %vm1076, %v1157, %v1156
    %v1159 = vrot.slane %v1044, 2
    %v1160 = vsel %vm1079, %v1159, %v1158
    %v1161 = vrot.slane %v1048, 1
    %v1162 = vsel %vm1082, %v1161, %v1160
    %v1163 = vsel %vm1085, %v1052, %v1162
    %v1164 = vrot.slane %v1056, 7
    %v1165 = vsel %vm1088, %v1164, %v1163
    %v1166 = vrot.slane %v1060, 6
    %v1167 = vsel %vm1091, %v1166, %v1165
    %v1169 = vrot.slane %v1032, 6
    %v1170 = vrot.slane %v1036, 5
    %v1171 = vsel %vm1073, %v1170, %v1169
    %v1172 = vrot.slane %v1040, 4
    %v1173 = vsel %vm1076, %v1172, %v1171
    %v1174 = vrot.slane %v1044, 3
    %v1175 = vsel %vm1079, %v1174, %v1173
    %v1176 = vrot.slane %v1048, 2
    %v1177 = vsel %vm1082, %v1176, %v1175
    %v1178 = vrot.slane %v1052, 1
    %v1179 = vsel %vm1085, %v1178, %v1177
    %v1180 = vsel %vm1088, %v1056, %v1179
    %v1181 = vrot.slane %v1060, 7
    %v1182 = vsel %vm1091, %v1181, %v1180
    %v1184 = vrot.slane %v1032, 7
    %v1185 = vrot.slane %v1036, 6
    %v1186 = vsel %vm1073, %v1185, %v1184
    %v1187 = vrot.slane %v1040, 5
    %v1188 = vsel %vm1076, %v1187, %v1186
    %v1189 = vrot.slane %v1044, 4
    %v1190 = vsel %vm1079, %v1189, %v1188
    %v1191 = vrot.slane %v1048, 3
    %v1192 = vsel %vm1082, %v1191, %v1190
    %v1193 = vrot.slane %v1052, 2
    %v1194 = vsel %vm1085, %v1193, %v1192
    %v1195 = vrot.slane %v1056, 1
    %v1196 = vsel %vm1088, %v1195, %v1194
    %v1197 = vsel %vm1091, %v1060, %v1196
    %v1207 = vrot.slane %v1037, 7
    %v1208 = vsel %vm1073, %v1207, %v1033
    %v1209 = vrot.slane %v1041, 6
    %v1210 = vsel %vm1076, %v1209, %v1208
    %v1211 = vrot.slane %v1045, 5
    %v1212 = vsel %vm1079, %v1211, %v1210
    %v1213 = vrot.slane %v1049, 4
    %v1214 = vsel %vm1082, %v1213, %v1212
    %v1215 = vrot.slane %v1053, 3
    %v1216 = vsel %vm1085, %v1215, %v1214
    %v1217 = vrot.slane %v1057, 2
    %v1218 = vsel %vm1088, %v1217, %v1216
    %v1219 = vrot.slane %v1061, 1
    %v1220 = vsel %vm1091, %v1219, %v1218
    %v1222 = vrot.slane %v1033, 1
    %v1223 = vsel %vm1073, %v1037, %v1222
    %v1224 = vrot.slane %v1041, 7
    %v1225 = vsel %vm1076, %v1224, %v1223
    %v1226 = vrot.slane %v1045, 6
    %v1227 = vsel %vm1079, %v1226, %v1225
    %v1228 = vrot.slane %v1049, 5
    %v1229 = vsel %vm1082, %v1228, %v1227
    %v1230 = vrot.slane %v1053, 4
    %v1231 = vsel %vm1085, %v1230, %v1229
    %v1232 = vrot.slane %v1057, 3
    %v1233 = vsel %vm1088, %v1232, %v1231
    %v1234 = vrot.slane %v1061, 2
    %v1235 = vsel %vm1091, %v1234, %v1233
    %v1237 = vrot.slane %v1033, 2
    %v1238 = vrot.slane %v1037, 1
    %v1239 = vsel %vm1073, %v1238, %v1237
    %v1240 = vsel %vm1076, %v1041, %v1239
    %v1241 = vrot.slane %v1045, 7
    %v1242 = vsel %vm1079, %v1241, %v1240
    %v1243 = vrot.slane %v1049, 6
    %v1244 = vsel %vm1082, %v1243, %v1242
    %v1245 = vrot.slane %v1053, 5
    %v1246 = vsel %vm1085, %v1245, %v1244
    %v1247 = vrot.slane %v1057, 4
    %v1248 = vsel %vm1088, %v1247, %v1246
    %v1249 = vrot.slane %v1061, 3
    %v1250 = vsel %vm1091, %v1249, %v1248
    %v1252 = vrot.slane %v1033, 3
    %v1253 = vrot.slane %v1037, 2
    %v1254 = vsel %vm1073, %v1253, %v1252
    %v1255 = vrot.slane %v1041, 1
    %v1256 = vsel %vm1076, %v1255, %v1254
    %v1257 = vsel %vm1079, %v1045, %v1256
    %v1258 = vrot.slane %v1049, 7
    %v1259 = vsel %vm1082, %v1258, %v1257
    %v1260 = vrot.slane %v1053, 6
    %v1261 = vsel %vm1085, %v1260, %v1259
    %v1262 = vrot.slane %v1057, 5
    %v1263 = vsel %vm1088, %v1262, %v1261
    %v1264 = vrot.slane %v1061, 4
    %v1265 = vsel %vm1091, %v1264, %v1263
    %v1267 = vrot.slane %v1033, 4
    %v1268 = vrot.slane %v1037, 3
    %v1269 = vsel %vm1073, %v1268, %v1267
    %v1270 = vrot.slane %v1041, 2
    %v1271 = vsel %vm1076, %v1270, %v1269
    %v1272 = vrot.slane %v1045, 1
    %v1273 = vsel %vm1079, %v1272, %v1271
    %v1274 = vsel %vm1082, %v1049, %v1273
    %v1275 = vrot.slane %v1053, 7
    %v1276 = vsel %vm1085, %v1275, %v1274
    %v1277 = vrot.slane %v1057, 6
    %v1278 = vsel %vm1088, %v1277, %v1276
    %v1279 = vrot.slane %v1061, 5
    %v1280 = vsel %vm1091, %v1279, %v1278
    %v1282 = vrot.slane %v1033, 5
    %v1283 = vrot.slane %v1037, 4
    %v1284 = vsel %vm1073, %v1283, %v1282
    %v1285 = vrot.slane %v1041, 3
    %v1286 = vsel %vm1076, %v1285, %v1284
    %v1287 = vrot.slane %v1045, 2
    %v1288 = vsel %vm1079, %v1287, %v1286
    %v1289 = vrot.slane %v1049, 1
    %v1290 = vsel %vm1082, %v1289, %v1288
    %v1291 = vsel %vm1085, %v1053, %v1290
    %v1292 = vrot.slane %v1057, 7
    %v1293 = vsel %vm1088, %v1292, %v1291
    %v1294 = vrot.slane %v1061, 6
    %v1295 = vsel %vm1091, %v1294, %v1293
    %v1297 = vrot.slane %v1033, 6
    %v1298 = vrot.slane %v1037, 5
    %v1299 = vsel %vm1073, %v1298, %v1297
    %v1300 = vrot.slane %v1041, 4
    %v1301 = vsel %vm1076, %v1300, %v1299
    %v1302 = vrot.slane %v1045, 3
    %v1303 = vsel %vm1079, %v1302, %v1301
    %v1304 = vrot.slane %v1049, 2
    %v1305 = vsel %vm1082, %v1304, %v1303
    %v1306 = vrot.slane %v1053, 1
    %v1307 = vsel %vm1085, %v1306, %v1305
    %v1308 = vsel %vm1088, %v1057, %v1307
    %v1309 = vrot.slane %v1061, 7
    %v1310 = vsel %vm1091, %v1309, %v1308
    %v1312 = vrot.slane %v1033, 7
    %v1313 = vrot.slane %v1037, 6
    %v1314 = vsel %vm1073, %v1313, %v1312
    %v1315 = vrot.slane %v1041, 5
    %v1316 = vsel %vm1076, %v1315, %v1314
    %v1317 = vrot.slane %v1045, 4
    %v1318 = vsel %vm1079, %v1317, %v1316
    %v1319 = vrot.slane %v1049, 3
    %v1320 = vsel %vm1082, %v1319, %v1318
    %v1321 = vrot.slane %v1053, 2
    %v1322 = vsel %vm1085, %v1321, %v1320
    %v1323 = vrot.slane %v1057, 1
    %v1324 = vsel %vm1088, %v1323, %v1322
    %v1325 = vsel %vm1091, %v1061, %v1324
    %v1335 = vrot.slane %v1038, 7
    %v1336 = vsel %vm1073, %v1335, %v1034
    %v1337 = vrot.slane %v1042, 6
    %v1338 = vsel %vm1076, %v1337, %v1336
    %v1339 = vrot.slane %v1046, 5
    %v1340 = vsel %vm1079, %v1339, %v1338
    %v1341 = vrot.slane %v1050, 4
    %v1342 = vsel %vm1082, %v1341, %v1340
    %v1343 = vrot.slane %v1054, 3
    %v1344 = vsel %vm1085, %v1343, %v1342
    %v1345 = vrot.slane %v1058, 2
    %v1346 = vsel %vm1088, %v1345, %v1344
    %v1347 = vrot.slane %v1062, 1
    %v1348 = vsel %vm1091, %v1347, %v1346
    %v1350 = vrot.slane %v1034, 1
    %v1351 = vsel %vm1073, %v1038, %v1350
    %v1352 = vrot.slane %v1042, 7
    %v1353 = vsel %vm1076, %v1352, %v1351
    %v1354 = vrot.slane %v1046, 6
    %v1355 = vsel %vm1079, %v1354, %v1353
    %v1356 = vrot.slane %v1050, 5
    %v1357 = vsel %vm1082, %v1356, %v1355
    %v1358 = vrot.slane %v1054, 4
    %v1359 = vsel %vm1085, %v1358, %v1357
    %v1360 = vrot.slane %v1058, 3
    %v1361 = vsel %vm1088, %v1360, %v1359
    %v1362 = vrot.slane %v1062, 2
    %v1363 = vsel %vm1091, %v1362, %v1361
    %v1365 = vrot.slane %v1034, 2
    %v1366 = vrot.slane %v1038, 1
    %v1367 = vsel %vm1073, %v1366, %v1365
    %v1368 = vsel %vm1076, %v1042, %v1367
    %v1369 = vrot.slane %v1046, 7
    %v1370 = vsel %vm1079, %v1369, %v1368
    %v1371 = vrot.slane %v1050, 6
    %v1372 = vsel %vm1082, %v1371, %v1370
    %v1373 = vrot.slane %v1054, 5
    %v1374 = vsel %vm1085, %v1373, %v1372
    %v1375 = vrot.slane %v1058, 4
    %v1376 = vsel %vm1088, %v1375, %v1374
    %v1377 = vrot.slane %v1062, 3
    %v1378 = vsel %vm1091, %v1377, %v1376
    %v1380 = vrot.slane %v1034, 3
    %v1381 = vrot.slane %v1038, 2
    %v1382 = vsel %vm1073, %v1381, %v1380
    %v1383 = vrot.slane %v1042, 1
    %v1384 = vsel %vm1076, %v1383, %v1382
    %v1385 = vsel %vm1079, %v1046, %v1384
    %v1386 = vrot.slane %v1050, 7
    %v1387 = vsel %vm1082, %v1386, %v1385
    %v1388 = vrot.slane %v1054, 6
    %v1389 = vsel %vm1085, %v1388, %v1387
    %v1390 = vrot.slane %v1058, 5
    %v1391 = vsel %vm1088, %v1390, %v1389
    %v1392 = vrot.slane %v1062, 4
    %v1393 = vsel %vm1091, %v1392, %v1391
    %v1395 = vrot.slane %v1034, 4
    %v1396 = vrot.slane %v1038, 3
    %v1397 = vsel %vm1073, %v1396, %v1395
    %v1398 = vrot.slane %v1042, 2
    %v1399 = vsel %vm1076, %v1398, %v1397
    %v1400 = vrot.slane %v1046, 1
    %v1401 = vsel %vm1079, %v1400, %v1399
    %v1402 = vsel %vm1082, %v1050, %v1401
    %v1403 = vrot.slane %v1054, 7
    %v1404 = vsel %vm1085, %v1403, %v1402
    %v1405 = vrot.slane %v1058, 6
    %v1406 = vsel %vm1088, %v1405, %v1404
    %v1407 = vrot.slane %v1062, 5
    %v1408 = vsel %vm1091, %v1407, %v1406
    %v1410 = vrot.slane %v1034, 5
    %v1411 = vrot.slane %v1038, 4
    %v1412 = vsel %vm1073, %v1411, %v1410
    %v1413 = vrot.slane %v1042, 3
    %v1414 = vsel %vm1076, %v1413, %v1412
    %v1415 = vrot.slane %v1046, 2
    %v1416 = vsel %vm1079, %v1415, %v1414
    %v1417 = vrot.slane %v1050, 1
    %v1418 = vsel %vm1082, %v1417, %v1416
    %v1419 = vsel %vm1085, %v1054, %v1418
    %v1420 = vrot.slane %v1058, 7
    %v1421 = vsel %vm1088, %v1420, %v1419
    %v1422 = vrot.slane %v1062, 6
    %v1423 = vsel %vm1091, %v1422, %v1421
    %v1425 = vrot.slane %v1034, 6
    %v1426 = vrot.slane %v1038, 5
    %v1427 = vsel %vm1073, %v1426, %v1425
    %v1428 = vrot.slane %v1042, 4
    %v1429 = vsel %vm1076, %v1428, %v1427
    %v1430 = vrot.slane %v1046, 3
    %v1431 = vsel %vm1079, %v1430, %v1429
    %v1432 = vrot.slane %v1050, 2
    %v1433 = vsel %vm1082, %v1432, %v1431
    %v1434 = vrot.slane %v1054, 1
    %v1435 = vsel %vm1085, %v1434, %v1433
    %v1436 = vsel %vm1088, %v1058, %v1435
    %v1437 = vrot.slane %v1062, 7
    %v1438 = vsel %vm1091, %v1437, %v1436
    %v1440 = vrot.slane %v1034, 7
    %v1441 = vrot.slane %v1038, 6
    %v1442 = vsel %vm1073, %v1441, %v1440
    %v1443 = vrot.slane %v1042, 5
    %v1444 = vsel %vm1076, %v1443, %v1442
    %v1445 = vrot.slane %v1046, 4
    %v1446 = vsel %vm1079, %v1445, %v1444
    %v1447 = vrot.slane %v1050, 3
    %v1448 = vsel %vm1082, %v1447, %v1446
    %v1449 = vrot.slane %v1054, 2
    %v1450 = vsel %vm1085, %v1449, %v1448
    %v1451 = vrot.slane %v1058, 1
    %v1452 = vsel %vm1088, %v1451, %v1450
    %v1453 = vsel %vm1091, %v1062, %v1452
    %v1463 = vrot.slane %v1039, 7
    %v1464 = vsel %vm1073, %v1463, %v1035
    %v1465 = vrot.slane %v1043, 6
    %v1466 = vsel %vm1076, %v1465, %v1464
    %v1467 = vrot.slane %v1047, 5
    %v1468 = vsel %vm1079, %v1467, %v1466
    %v1469 = vrot.slane %v1051, 4
    %v1470 = vsel %vm1082, %v1469, %v1468
    %v1471 = vrot.slane %v1055, 3
    %v1472 = vsel %vm1085, %v1471, %v1470
    %v1473 = vrot.slane %v1059, 2
    %v1474 = vsel %vm1088, %v1473, %v1472
    %v1475 = vrot.slane %v1063, 1
    %v1476 = vsel %vm1091, %v1475, %v1474
    %v1478 = vrot.slane %v1035, 1
    %v1479 = vsel %vm1073, %v1039, %v1478
    %v1480 = vrot.slane %v1043, 7
    %v1481 = vsel %vm1076, %v1480, %v1479
    %v1482 = vrot.slane %v1047, 6
    %v1483 = vsel %vm1079, %v1482, %v1481
    %v1484 = vrot.slane %v1051, 5
    %v1485 = vsel %vm1082, %v1484, %v1483
    %v1486 = vrot.slane %v1055, 4
    %v1487 = vsel %vm1085, %v1486, %v1485
    %v1488 = vrot.slane %v1059, 3
    %v1489 = vsel %vm1088, %v1488, %v1487
    %v1490 = vrot.slane %v1063, 2
    %v1491 = vsel %vm1091, %v1490, %v1489
    %v1493 = vrot.slane %v1035, 2
    %v1494 = vrot.slane %v1039, 1
    %v1495 = vsel %vm1073, %v1494, %v1493
    %v1496 = vsel %vm1076, %v1043, %v1495
    %v1497 = vrot.slane %v1047, 7
    %v1498 = vsel %vm1079, %v1497, %v1496
    %v1499 = vrot.slane %v1051, 6
    %v1500 = vsel %vm1082, %v1499, %v1498
    %v1501 = vrot.slane %v1055, 5
    %v1502 = vsel %vm1085, %v1501, %v1500
    %v1503 = vrot.slane %v1059, 4
    %v1504 = vsel %vm1088, %v1503, %v1502
    %v1505 = vrot.slane %v1063, 3
    %v1506 = vsel %vm1091, %v1505, %v1504
    %v1508 = vrot.slane %v1035, 3
    %v1509 = vrot.slane %v1039, 2
    %v1510 = vsel %vm1073, %v1509, %v1508
    %v1511 = vrot.slane %v1043, 1
    %v1512 = vsel %vm1076, %v1511, %v1510
    %v1513 = vsel %vm1079, %v1047, %v1512
    %v1514 = vrot.slane %v1051, 7
    %v1515 = vsel %vm1082, %v1514, %v1513
    %v1516 = vrot.slane %v1055, 6
    %v1517 = vsel %vm1085, %v1516, %v1515
    %v1518 = vrot.slane %v1059, 5
    %v1519 = vsel %vm1088, %v1518, %v1517
    %v1520 = vrot.slane %v1063, 4
    %v1521 = vsel %vm1091, %v1520, %v1519
    %v1523 = vrot.slane %v1035, 4
    %v1524 = vrot.slane %v1039, 3
    %v1525 = vsel %vm1073, %v1524, %v1523
    %v1526 = vrot.slane %v1043, 2
    %v1527 = vsel %vm1076, %v1526, %v1525
    %v1528 = vrot.slane %v1047, 1
    %v1529 = vsel %vm1079, %v1528, %v1527
    %v1530 = vsel %vm1082, %v1051, %v1529
    %v1531 = vrot.slane %v1055, 7
    %v1532 = vsel %vm1085, %v1531, %v1530
    %v1533 = vrot.slane %v1059, 6
    %v1534 = vsel %vm1088, %v1533, %v1532
    %v1535 = vrot.slane %v1063, 5
    %v1536 = vsel %vm1091, %v1535, %v1534
    %v1538 = vrot.slane %v1035, 5
    %v1539 = vrot.slane %v1039, 4
    %v1540 = vsel %vm1073, %v1539, %v1538
    %v1541 = vrot.slane %v1043, 3
    %v1542 = vsel %vm1076, %v1541, %v1540
    %v1543 = vrot.slane %v1047, 2
    %v1544 = vsel %vm1079, %v1543, %v1542
    %v1545 = vrot.slane %v1051, 1
    %v1546 = vsel %vm1082, %v1545, %v1544
    %v1547 = vsel %vm1085, %v1055, %v1546
    %v1548 = vrot.slane %v1059, 7
    %v1549 = vsel %vm1088, %v1548, %v1547
    %v1550 = vrot.slane %v1063, 6
    %v1551 = vsel %vm1091, %v1550, %v1549
    %v1553 = vrot.slane %v1035, 6
    %v1554 = vrot.slane %v1039, 5
    %v1555 = vsel %vm1073, %v1554, %v1553
    %v1556 = vrot.slane %v1043, 4
    %v1557 = vsel %vm1076, %v1556, %v1555
    %v1558 = vrot.slane %v1047, 3
    %v1559 = vsel %vm1079, %v1558, %v1557
    %v1560 = vrot.slane %v1051, 2
    %v1561 = vsel %vm1082, %v1560, %v1559
    %v1562 = vrot.slane %v1055, 1
    %v1563 = vsel %vm1085, %v1562, %v1561
    %v1564 = vsel %vm1088, %v1059, %v1563
    %v1565 = vrot.slane %v1063, 7
    %v1566 = vsel %vm1091, %v1565, %v1564
    %v1568 = vrot.slane %v1035, 7
    %v1569 = vrot.slane %v1039, 6
    %v1570 = vsel %vm1073, %v1569, %v1568
    %v1571 = vrot.slane %v1043, 5
    %v1572 = vsel %vm1076, %v1571, %v1570
    %v1573 = vrot.slane %v1047, 4
    %v1574 = vsel %vm1079, %v1573, %v1572
    %v1575 = vrot.slane %v1051, 3
    %v1576 = vsel %vm1082, %v1575, %v1574
    %v1577 = vrot.slane %v1055, 2
    %v1578 = vsel %vm1085, %v1577, %v1576
    %v1579 = vrot.slane %v1059, 1
    %v1580 = vsel %vm1088, %v1579, %v1578
    %v1581 = vsel %vm1091, %v1063, %v1580
    %v1583 = vpack.c.bf16 %v1107, %v1092
    %v1584 = vpack.c.bf16 %v1137, %v1122
    %v1585 = vpack.c.bf16 %v1167, %v1152
    %v1586 = vpack.c.bf16 %v1197, %v1182
    %v1587 = vpack.c.bf16 %v1235, %v1220
    %v1588 = vpack.c.bf16 %v1265, %v1250
    %v1589 = vpack.c.bf16 %v1295, %v1280
    %v1590 = vpack.c.bf16 %v1325, %v1310
    %v1591 = vpack.c.bf16 %v1363, %v1348
    %v1592 = vpack.c.bf16 %v1393, %v1378
    %v1593 = vpack.c.bf16 %v1423, %v1408
    %v1594 = vpack.c.bf16 %v1453, %v1438
    %v1595 = vpack.c.bf16 %v1491, %v1476
    %v1596 = vpack.c.bf16 %v1521, %v1506
    %v1597 = vpack.c.bf16 %v1551, %v1536
    %v1598 = vpack.c.bf16 %v1581, %v1566
    %v1599 = vld [vmem:[#allocation7] sm:$0xff]
    %v1600 = vld [vmem:[#allocation7 + $0x8] sm:$0xf]
    %v1601 = vld [vmem:[#allocation7 + $0xc] sm:$0xff]
    %v1602 = vld [vmem:[#allocation7 + $0x14] sm:$0xf]
    %v1603 = vld [vmem:[#allocation7 + $0x18] sm:$0xff]
    %v1604 = vld [vmem:[#allocation7 + $0x20] sm:$0xf]
    %v1605 = vld [vmem:[#allocation7 + $0x24] sm:$0xff]
    %v1606 = vld [vmem:[#allocation7 + $0x2c] sm:$0xf]
    %v1607 = vld [vmem:[#allocation7 + $0x30] sm:$0xff]
    %v1608 = vld [vmem:[#allocation7 + $0x38] sm:$0xf]
    %v1609 = vld [vmem:[#allocation7 + $0x3c] sm:$0xff]
    %v1610 = vld [vmem:[#allocation7 + $0x44] sm:$0xf]
    %v1611 = vld [vmem:[#allocation7 + $0x48] sm:$0xff]
    %v1612 = vld [vmem:[#allocation7 + $0x50] sm:$0xf]
    %v1613 = vld [vmem:[#allocation7 + $0x54] sm:$0xff]
    %v1614 = vld [vmem:[#allocation7 + $0x5c] sm:$0xf]
    %v1615 = vld [vmem:[#allocation7 + $0x60] sm:$0xff]
    %v1616 = vld [vmem:[#allocation7 + $0x68] sm:$0xf]
    %v1617 = vld [vmem:[#allocation7 + $0x6c] sm:$0xff]
    %v1618 = vld [vmem:[#allocation7 + $0x74] sm:$0xf]
    %v1619 = vld [vmem:[#allocation7 + $0x78] sm:$0xff]
    %v1620 = vld [vmem:[#allocation7 + $0x80] sm:$0xf]
    %v1621 = vld [vmem:[#allocation7 + $0x84] sm:$0xff]
    %v1622 = vld [vmem:[#allocation7 + $0x8c] sm:$0xf]
    %v1623 = vld [vmem:[#allocation7 + $0x90] sm:$0xff]
    %v1624 = vld [vmem:[#allocation7 + $0x98] sm:$0xf]
    %v1625 = vld [vmem:[#allocation7 + $0x9c] sm:$0xff]
    %v1626 = vld [vmem:[#allocation7 + $0xa4] sm:$0xf]
    %v1627 = vld [vmem:[#allocation7 + $0xa8] sm:$0xff]
    %v1628 = vld [vmem:[#allocation7 + $0xb0] sm:$0xf]
    %v1629 = vld [vmem:[#allocation7 + $0xb4] sm:$0xff]
    %v1630 = vld [vmem:[#allocation7 + $0xbc] sm:$0xf]
    %v1631 = vld [vmem:[%s4] sm:$0x7]
    %v1633 = vlaneseq
    %v1634 = vshrl.u32 %v1633, 7
    %v1635 = vsub.s32 0, %v1634
    %v1636 = vrot.slane %v1631, %v1635
    %v1637 = vlaneseq
    %v1638 = vshrl.u32 %v1637, 7
    %v1639 = vsub.s32 1, %v1638
    %v1640 = vrot.slane %v1631, %v1639
    %v1641 = vlaneseq
    %v1642 = vshrl.u32 %v1641, 7
    %v1643 = vsub.s32 2, %v1642
    %v1644 = vrot.slane %v1631, %v1643
    %v1680 = vunpack.c.l.b16 %v1599
    %v1681 = vunpack.c.h.b16 %v1599
    %v1682 = vunpack.c.l.b16 %v1600
    %v1683 = vunpack.c.l.b16 %v1601
    %v1684 = vunpack.c.h.b16 %v1601
    %v1685 = vunpack.c.l.b16 %v1602
    %v1686 = vunpack.c.l.b16 %v1603
    %v1687 = vunpack.c.h.b16 %v1603
    %v1688 = vunpack.c.l.b16 %v1604
    %v1689 = vunpack.c.l.b16 %v1605
    %v1690 = vunpack.c.h.b16 %v1605
    %v1691 = vunpack.c.l.b16 %v1606
    %v1692 = vunpack.c.l.b16 %v1607
    %v1693 = vunpack.c.h.b16 %v1607
    %v1694 = vunpack.c.l.b16 %v1608
    %v1695 = vunpack.c.l.b16 %v1609
    %v1696 = vunpack.c.h.b16 %v1609
    %v1697 = vunpack.c.l.b16 %v1610
    %v1698 = vunpack.c.l.b16 %v1611
    %v1699 = vunpack.c.h.b16 %v1611
    %v1700 = vunpack.c.l.b16 %v1612
    %v1701 = vunpack.c.l.b16 %v1613
    %v1702 = vunpack.c.h.b16 %v1613
    %v1703 = vunpack.c.l.b16 %v1614
    %v1704 = vunpack.c.l.b16 %v1615
    %v1705 = vunpack.c.h.b16 %v1615
    %v1706 = vunpack.c.l.b16 %v1616
    %v1707 = vunpack.c.l.b16 %v1617
    %v1708 = vunpack.c.h.b16 %v1617
    %v1709 = vunpack.c.l.b16 %v1618
    %v1710 = vunpack.c.l.b16 %v1619
    %v1711 = vunpack.c.h.b16 %v1619
    %v1712 = vunpack.c.l.b16 %v1620
    %v1713 = vunpack.c.l.b16 %v1621
    %v1714 = vunpack.c.h.b16 %v1621
    %v1715 = vunpack.c.l.b16 %v1622
    %v1716 = vunpack.c.l.b16 %v1623
    %v1717 = vunpack.c.h.b16 %v1623
    %v1718 = vunpack.c.l.b16 %v1624
    %v1719 = vunpack.c.l.b16 %v1625
    %v1720 = vunpack.c.h.b16 %v1625
    %v1721 = vunpack.c.l.b16 %v1626
    %v1722 = vunpack.c.l.b16 %v1627
    %v1723 = vunpack.c.h.b16 %v1627
    %v1724 = vunpack.c.l.b16 %v1628
    %v1725 = vunpack.c.l.b16 %v1629
    %v1726 = vunpack.c.h.b16 %v1629
    %v1727 = vunpack.c.l.b16 %v1630
    %v1728 = vpack.c.b16 %v1683, %v1680
    %v1729 = vpack.c.b16 %v1684, %v1681
    %v1730 = vpack.c.b16 %v1685, %v1682
    %v1731 = vpack.c.b16 %v1689, %v1686
    %v1732 = vpack.c.b16 %v1690, %v1687
    %v1733 = vpack.c.b16 %v1691, %v1688
    %v1734 = vpack.c.b16 %v1695, %v1692
    %v1735 = vpack.c.b16 %v1696, %v1693
    %v1736 = vpack.c.b16 %v1697, %v1694
    %v1737 = vpack.c.b16 %v1701, %v1698
    %v1738 = vpack.c.b16 %v1702, %v1699
    %v1739 = vpack.c.b16 %v1703, %v1700
    %v1740 = vpack.c.b16 %v1707, %v1704
    %v1741 = vpack.c.b16 %v1708, %v1705
    %v1742 = vpack.c.b16 %v1709, %v1706
    %v1743 = vpack.c.b16 %v1713, %v1710
    %v1744 = vpack.c.b16 %v1714, %v1711
    %v1745 = vpack.c.b16 %v1715, %v1712
    %v1746 = vpack.c.b16 %v1719, %v1716
    %v1747 = vpack.c.b16 %v1720, %v1717
    %v1748 = vpack.c.b16 %v1721, %v1718
    %v1749 = vpack.c.b16 %v1725, %v1722
    %v1750 = vpack.c.b16 %v1726, %v1723
    %v1751 = vpack.c.b16 %v1727, %v1724
    %1776 = vmatprep.subr.bf16.mxu0 %v1729
    %1777 = vmatpush1.bf16.msra.mxu0 %v1728
    %1778 = vmatprep.subr.bf16.mxu0 %v1732
    %1779 = vmatpush1.bf16.msra.mxu0 %v1731
    %1780 = vmatprep.subr.bf16.mxu0 %v1735
    %1781 = vmatpush1.bf16.msra.mxu0 %v1734
    %1782 = vmatprep.subr.bf16.mxu0 %v1738
    %1783 = vmatpush1.bf16.msra.mxu0 %v1737
    %1784 = vmatprep.subr.bf16.mxu0 %v1741
    %1785 = vmatpush1.bf16.msra.mxu0 %v1740
    %1786 = vmatprep.subr.bf16.mxu0 %v1744
    %1787 = vmatpush1.bf16.msra.mxu0 %v1743
    %1788 = vmatprep.subr.bf16.mxu0 %v1747
    %1789 = vmatpush1.bf16.msra.mxu0 %v1746
    %1790 = vmatprep.subr.bf16.mxu0 %v1750
    %1791 = vmatpush1.bf16.msra.mxu0 %v1749
    %1792 = vmatprep.subr.bf16.mxu0 0
    %1793 = vmatpush1.bf16.msra.mxu0 0
    %1794 = vmatprep.subr.bf16.mxu0 0
    %1795 = vmatpush1.bf16.msra.mxu0 0
    %1796 = vmatprep.subr.bf16.mxu0 0
    %1797 = vmatpush1.bf16.msra.mxu0 0
    %1798 = vmatprep.subr.bf16.mxu0 0
    %1799 = vmatpush1.bf16.msra.mxu0 0
    %1800 = vmatprep.subr.bf16.mxu0 0
    %1801 = vmatpush1.bf16.msra.mxu0 0
    %1802 = vmatprep.subr.bf16.mxu0 0
    %1803 = vmatpush1.bf16.msra.mxu0 0
    %1804 = vmatprep.subr.bf16.mxu0 0
    %1805 = vmatpush1.bf16.msra.mxu0 0
    %1806 = vmatprep.subr.bf16.mxu0 0
    %1807 = vmatpush1.bf16.msra.mxu0 0
    %1808 = vmatprep.mubr.bf16.mxu0 0
    %1809 = vmatmul.mubr.bf16.gmra.mrb[0].mxu0 %v1583
    %v1810 = vpop.f32.mrb[0].mxu0
    %v1811 = vadd.f32 %v1636, %v1810
    %v1812 = vpop.f32.mrb[0].mxu0
    %v1813 = vadd.f32 %v1640, %v1812
    %v1814 = vpop.f32.mrb[0].mxu0
    %v1815 = vadd.f32 %v1636, %v1814
    %v1816 = vpop.f32.mrb[0].mxu0
    %v1817 = vadd.f32 %v1640, %v1816
    %1818 = vmatprep.mubr.bf16.mxu0 0
    %1819 = vmatmul.mubr.bf16.gmra.mrb[0].mxu0 %v1584
    %v1820 = vpop.f32.mrb[0].mxu0
    %v1821 = vadd.f32 %v1636, %v1820
    %v1822 = vpop.f32.mrb[0].mxu0
    %v1823 = vadd.f32 %v1640, %v1822
    %v1824 = vpop.f32.mrb[0].mxu0
    %v1825 = vadd.f32 %v1636, %v1824
    %v1826 = vpop.f32.mrb[0].mxu0
    %v1827 = vadd.f32 %v1640, %v1826
    %1828 = vmatprep.mubr.bf16.mxu0 0
    %1829 = vmatmul.mubr.bf16.gmra.mrb[0].mxu0 %v1585
    %v1830 = vpop.f32.mrb[0].mxu0
    %v1831 = vadd.f32 %v1636, %v1830
    %v1832 = vpop.f32.mrb[0].mxu0
    %v1833 = vadd.f32 %v1640, %v1832
    %v1834 = vpop.f32.mrb[0].mxu0
    %v1835 = vadd.f32 %v1636, %v1834
    %v1836 = vpop.f32.mrb[0].mxu0
    %v1837 = vadd.f32 %v1640, %v1836
    %1838 = vmatprep.mubr.bf16.mxu0 0
    %1839 = vmatmul.mubr.bf16.gmra.mrb[0].mxu0 %v1586
    %v1840 = vpop.f32.mrb[0].mxu0
    %v1841 = vadd.f32 %v1636, %v1840
    %v1842 = vpop.f32.mrb[0].mxu0
    %v1843 = vadd.f32 %v1640, %v1842
    %v1844 = vpop.f32.mrb[0].mxu0
    %v1845 = vadd.f32 %v1636, %v1844
    %v1846 = vpop.f32.mrb[0].mxu0
    %v1847 = vadd.f32 %v1640, %v1846
    %1848 = vmatprep.mubr.bf16.mxu0 0
    %1849 = vmatmul.mubr.bf16.gmra.mrb[0].mxu0 %v1587
    %v1850 = vpop.f32.mrb[0].mxu0
    %v1851 = vadd.f32 %v1636, %v1850
    %v1852 = vpop.f32.mrb[0].mxu0
    %v1853 = vadd.f32 %v1640, %v1852
    %v1854 = vpop.f32.mrb[0].mxu0
    %v1855 = vadd.f32 %v1636, %v1854
    %v1856 = vpop.f32.mrb[0].mxu0
    %v1857 = vadd.f32 %v1640, %v1856
    %1858 = vmatprep.mubr.bf16.mxu0 0
    %1859 = vmatmul.mubr.bf16.gmra.mrb[0].mxu0 %v1588
    %v1860 = vpop.f32.mrb[0].mxu0
    %v1861 = vadd.f32 %v1636, %v1860
    %v1862 = vpop.f32.mrb[0].mxu0
    %v1863 = vadd.f32 %v1640, %v1862
    %v1864 = vpop.f32.mrb[0].mxu0
    %v1865 = vadd.f32 %v1636, %v1864
    %v1866 = vpop.f32.mrb[0].mxu0
    %v1867 = vadd.f32 %v1640, %v1866
    %1868 = vmatprep.mubr.bf16.mxu0 0
    %1869 = vmatmul.mubr.bf16.gmra.mrb[0].mxu0 %v1589
    %v1870 = vpop.f32.mrb[0].mxu0
    %v1871 = vadd.f32 %v1636, %v1870
    %v1872 = vpop.f32.mrb[0].mxu0
    %v1873 = vadd.f32 %v1640, %v1872
    %v1874 = vpop.f32.mrb[0].mxu0
    %v1875 = vadd.f32 %v1636, %v1874
    %v1876 = vpop.f32.mrb[0].mxu0
    %v1877 = vadd.f32 %v1640, %v1876
    %1878 = vmatprep.mubr.bf16.mxu0 0
    %1879 = vmatmul.mubr.bf16.gmra.mrb[0].mxu0 %v1590
    %v1880 = vpop.f32.mrb[0].mxu0
    %v1881 = vadd.f32 %v1636, %v1880
    %v1882 = vpop.f32.mrb[0].mxu0
    %v1883 = vadd.f32 %v1640, %v1882
    %v1884 = vpop.f32.mrb[0].mxu0
    %v1885 = vadd.f32 %v1636, %v1884
    %v1886 = vpop.f32.mrb[0].mxu0
    %v1887 = vadd.f32 %v1640, %v1886
    %1888 = vmatprep.mubr.bf16.mxu0 0
    %1889 = vmatmul.mubr.bf16.gmra.mrb[0].mxu0 %v1591
    %v1890 = vpop.f32.mrb[0].mxu0
    %v1891 = vadd.f32 %v1636, %v1890
    %v1892 = vpop.f32.mrb[0].mxu0
    %v1893 = vadd.f32 %v1640, %v1892
    %v1894 = vpop.f32.mrb[0].mxu0
    %v1895 = vadd.f32 %v1636, %v1894
    %v1896 = vpop.f32.mrb[0].mxu0
    %v1897 = vadd.f32 %v1640, %v1896
    %1898 = vmatprep.mubr.bf16.mxu0 0
    %1899 = vmatmul.mubr.bf16.gmra.mrb[0].mxu0 %v1592
    %v1900 = vpop.f32.mrb[0].mxu0
    %v1901 = vadd.f32 %v1636, %v1900
    %v1902 = vpop.f32.mrb[0].mxu0
    %v1903 = vadd.f32 %v1640, %v1902
    %v1904 = vpop.f32.mrb[0].mxu0
    %v1905 = vadd.f32 %v1636, %v1904
    %v1906 = vpop.f32.mrb[0].mxu0
    %v1907 = vadd.f32 %v1640, %v1906
    %1908 = vmatprep.mubr.bf16.mxu0 0
    %1909 = vmatmul.mubr.bf16.gmra.mrb[0].mxu0 %v1593
    %v1910 = vpop.f32.mrb[0].mxu0
    %v1911 = vadd.f32 %v1636, %v1910
    %v1912 = vpop.f32.mrb[0].mxu0
    %v1913 = vadd.f32 %v1640, %v1912
    %v1914 = vpop.f32.mrb[0].mxu0
    %v1915 = vadd.f32 %v1636, %v1914
    %v1916 = vpop.f32.mrb[0].mxu0
    %v1917 = vadd.f32 %v1640, %v1916
    %1918 = vmatprep.mubr.bf16.mxu0 0
    %1919 = vmatmul.mubr.bf16.gmra.mrb[0].mxu0 %v1594
    %v1920 = vpop.f32.mrb[0].mxu0
    %v1921 = vadd.f32 %v1636, %v1920
    %v1922 = vpop.f32.mrb[0].mxu0
    %v1923 = vadd.f32 %v1640, %v1922
    %v1924 = vpop.f32.mrb[0].mxu0
    %v1925 = vadd.f32 %v1636, %v1924
    %v1926 = vpop.f32.mrb[0].mxu0
    %v1927 = vadd.f32 %v1640, %v1926
    %1928 = vmatprep.mubr.bf16.mxu0 0
    %1929 = vmatmul.mubr.bf16.gmra.mrb[0].mxu0 %v1595
    %v1930 = vpop.f32.mrb[0].mxu0
    %v1931 = vadd.f32 %v1636, %v1930
    %v1932 = vpop.f32.mrb[0].mxu0
    %v1933 = vadd.f32 %v1640, %v1932
    %v1934 = vpop.f32.mrb[0].mxu0
    %v1935 = vadd.f32 %v1636, %v1934
    %v1936 = vpop.f32.mrb[0].mxu0
    %v1937 = vadd.f32 %v1640, %v1936
    %1938 = vmatprep.mubr.bf16.mxu0 0
    %1939 = vmatmul.mubr.bf16.gmra.mrb[0].mxu0 %v1596
    %v1940 = vpop.f32.mrb[0].mxu0
    %v1941 = vadd.f32 %v1636, %v1940
    %v1942 = vpop.f32.mrb[0].mxu0
    %v1943 = vadd.f32 %v1640, %v1942
    %v1944 = vpop.f32.mrb[0].mxu0
    %v1945 = vadd.f32 %v1636, %v1944
    %v1946 = vpop.f32.mrb[0].mxu0
    %v1947 = vadd.f32 %v1640, %v1946
    %1948 = vmatprep.mubr.bf16.mxu0 0
    %1949 = vmatmul.mubr.bf16.gmra.mrb[0].mxu0 %v1597
    %v1950 = vpop.f32.mrb[0].mxu0
    %v1951 = vadd.f32 %v1636, %v1950
    %v1952 = vpop.f32.mrb[0].mxu0
    %v1953 = vadd.f32 %v1640, %v1952
    %v1954 = vpop.f32.mrb[0].mxu0
    %v1955 = vadd.f32 %v1636, %v1954
    %v1956 = vpop.f32.mrb[0].mxu0
    %v1957 = vadd.f32 %v1640, %v1956
    %1958 = vmatprep.mubr.bf16.mxu0 0
    %1959 = vmatmul.mubr.bf16.gmra.mrb[0].mxu0 %v1598
    %v1960 = vpop.f32.mrb[0].mxu0
    %v1961 = vadd.f32 %v1636, %v1960
    %v1962 = vpop.f32.mrb[0].mxu0
    %v1963 = vadd.f32 %v1640, %v1962
    %v1964 = vpop.f32.mrb[0].mxu0
    %v1965 = vadd.f32 %v1636, %v1964
    %v1966 = vpop.f32.mrb[0].mxu0
    %v1967 = vadd.f32 %v1640, %v1966
    %1968 = vdwg.mxu0
    %1969 = vmatprep.subr.bf16.mxu0 0
    %1970 = vmatpush1.bf16.msra.mxu0 %v1730
    %1971 = vmatprep.subr.bf16.mxu0 0
    %1972 = vmatpush1.bf16.msra.mxu0 %v1733
    %1973 = vmatprep.subr.bf16.mxu0 0
    %1974 = vmatpush1.bf16.msra.mxu0 %v1736
    %1975 = vmatprep.subr.bf16.mxu0 0
    %1976 = vmatpush1.bf16.msra.mxu0 %v1739
    %1977 = vmatprep.subr.bf16.mxu0 0
    %1978 = vmatpush1.bf16.msra.mxu0 %v1742
    %1979 = vmatprep.subr.bf16.mxu0 0
    %1980 = vmatpush1.bf16.msra.mxu0 %v1745
    %1981 = vmatprep.subr.bf16.mxu0 0
    %1982 = vmatpush1.bf16.msra.mxu0 %v1748
    %1983 = vmatprep.subr.bf16.mxu0 0
    %1984 = vmatpush1.bf16.msra.mxu0 %v1751
    %1985 = vmatprep.subr.bf16.mxu0 0
    %1986 = vmatpush1.bf16.msra.mxu0 0
    %1987 = vmatprep.subr.bf16.mxu0 0
    %1988 = vmatpush1.bf16.msra.mxu0 0
    %1989 = vmatprep.subr.bf16.mxu0 0
    %1990 = vmatpush1.bf16.msra.mxu0 0
    %1991 = vmatprep.subr.bf16.mxu0 0
    %1992 = vmatpush1.bf16.msra.mxu0 0
    %1993 = vmatprep.subr.bf16.mxu0 0
    %1994 = vmatpush1.bf16.msra.mxu0 0
    %1995 = vmatprep.subr.bf16.mxu0 0
    %1996 = vmatpush1.bf16.msra.mxu0 0
    %1997 = vmatprep.subr.bf16.mxu0 0
    %1998 = vmatpush1.bf16.msra.mxu0 0
    %1999 = vmatprep.subr.bf16.mxu0 0
    %2000 = vmatpush1.bf16.msra.mxu0 0
    %2001 = vmatprep.mubr.bf16.mxu0 0
    %2002 = vmatmul.mubr.bf16.gmra.mrb[0].mxu0 %v1583
    %v2003 = vpop.f32.mrb[0].mxu0
    %v2004 = vadd.f32 %v1644, %v2003
    %v2005 = vpop.f32.mrb[0].mxu0
    %v2006 = vpop.f32.mrb[0].mxu0
    %v2007 = vadd.f32 %v1644, %v2006
    %v2008 = vpop.f32.mrb[0].mxu0
    %2009 = vmatprep.mubr.bf16.mxu0 0
    %2010 = vmatmul.mubr.bf16.gmra.mrb[0].mxu0 %v1584
    %v2011 = vpop.f32.mrb[0].mxu0
    %v2012 = vadd.f32 %v1644, %v2011
    %v2013 = vpop.f32.mrb[0].mxu0
    %v2014 = vpop.f32.mrb[0].mxu0
    %v2015 = vadd.f32 %v1644, %v2014
    %v2016 = vpop.f32.mrb[0].mxu0
    %2017 = vmatprep.mubr.bf16.mxu0 0
    %2018 = vmatmul.mubr.bf16.gmra.mrb[0].mxu0 %v1585
    %v2019 = vpop.f32.mrb[0].mxu0
    %v2020 = vadd.f32 %v1644, %v2019
    %v2021 = vpop.f32.mrb[0].mxu0
    %v2022 = vpop.f32.mrb[0].mxu0
    %v2023 = vadd.f32 %v1644, %v2022
    %v2024 = vpop.f32.mrb[0].mxu0
    %2025 = vmatprep.mubr.bf16.mxu0 0
    %2026 = vmatmul.mubr.bf16.gmra.mrb[0].mxu0 %v1586
    %v2027 = vpop.f32.mrb[0].mxu0
    %v2028 = vadd.f32 %v1644, %v2027
    %v2029 = vpop.f32.mrb[0].mxu0
    %v2030 = vpop.f32.mrb[0].mxu0
    %v2031 = vadd.f32 %v1644, %v2030
    %v2032 = vpop.f32.mrb[0].mxu0
    %2033 = vmatprep.mubr.bf16.mxu0 0
    %2034 = vmatmul.mubr.bf16.gmra.mrb[0].mxu0 %v1587
    %v2035 = vpop.f32.mrb[0].mxu0
    %v2036 = vadd.f32 %v1644, %v2035
    %v2037 = vpop.f32.mrb[0].mxu0
    %v2038 = vpop.f32.mrb[0].mxu0
    %v2039 = vadd.f32 %v1644, %v2038
    %v2040 = vpop.f32.mrb[0].mxu0
    %2041 = vmatprep.mubr.bf16.mxu0 0
    %2042 = vmatmul.mubr.bf16.gmra.mrb[0].mxu0 %v1588
    %v2043 = vpop.f32.mrb[0].mxu0
    %v2044 = vadd.f32 %v1644, %v2043
    %v2045 = vpop.f32.mrb[0].mxu0
    %v2046 = vpop.f32.mrb[0].mxu0
    %v2047 = vadd.f32 %v1644, %v2046
    %v2048 = vpop.f32.mrb[0].mxu0
    %2049 = vmatprep.mubr.bf16.mxu0 0
    %2050 = vmatmul.mubr.bf16.gmra.mrb[0].mxu0 %v1589
    %v2051 = vpop.f32.mrb[0].mxu0
    %v2052 = vadd.f32 %v1644, %v2051
    %v2053 = vpop.f32.mrb[0].mxu0
    %v2054 = vpop.f32.mrb[0].mxu0
    %v2055 = vadd.f32 %v1644, %v2054
    %v2056 = vpop.f32.mrb[0].mxu0
    %2057 = vmatprep.mubr.bf16.mxu0 0
    %2058 = vmatmul.mubr.bf16.gmra.mrb[0].mxu0 %v1590
    %v2059 = vpop.f32.mrb[0].mxu0
    %v2060 = vadd.f32 %v1644, %v2059
    %v2061 = vpop.f32.mrb[0].mxu0
    %v2062 = vpop.f32.mrb[0].mxu0
    %v2063 = vadd.f32 %v1644, %v2062
    %v2064 = vpop.f32.mrb[0].mxu0
    %2065 = vmatprep.mubr.bf16.mxu0 0
    %2066 = vmatmul.mubr.bf16.gmra.mrb[0].mxu0 %v1591
    %v2067 = vpop.f32.mrb[0].mxu0
    %v2068 = vadd.f32 %v1644, %v2067
    %v2069 = vpop.f32.mrb[0].mxu0
    %v2070 = vpop.f32.mrb[0].mxu0
    %v2071 = vadd.f32 %v1644, %v2070
    %v2072 = vpop.f32.mrb[0].mxu0
    %2073 = vmatprep.mubr.bf16.mxu0 0
    %2074 = vmatmul.mubr.bf16.gmra.mrb[0].mxu0 %v1592
    %v2075 = vpop.f32.mrb[0].mxu0
    %v2076 = vadd.f32 %v1644, %v2075
    %v2077 = vpop.f32.mrb[0].mxu0
    %v2078 = vpop.f32.mrb[0].mxu0
    %v2079 = vadd.f32 %v1644, %v2078
    %v2080 = vpop.f32.mrb[0].mxu0
    %2081 = vmatprep.mubr.bf16.mxu0 0
    %2082 = vmatmul.mubr.bf16.gmra.mrb[0].mxu0 %v1593
    %v2083 = vpop.f32.mrb[0].mxu0
    %v2084 = vadd.f32 %v1644, %v2083
    %v2085 = vpop.f32.mrb[0].mxu0
    %v2086 = vpop.f32.mrb[0].mxu0
    %v2087 = vadd.f32 %v1644, %v2086
    %v2088 = vpop.f32.mrb[0].mxu0
    %2089 = vmatprep.mubr.bf16.mxu0 0
    %2090 = vmatmul.mubr.bf16.gmra.mrb[0].mxu0 %v1594
    %v2091 = vpop.f32.mrb[0].mxu0
    %v2092 = vadd.f32 %v1644, %v2091
    %v2093 = vpop.f32.mrb[0].mxu0
    %v2094 = vpop.f32.mrb[0].mxu0
    %v2095 = vadd.f32 %v1644, %v2094
    %v2096 = vpop.f32.mrb[0].mxu0
    %2097 = vmatprep.mubr.bf16.mxu0 0
    %2098 = vmatmul.mubr.bf16.gmra.mrb[0].mxu0 %v1595
    %v2099 = vpop.f32.mrb[0].mxu0
    %v2100 = vadd.f32 %v1644, %v2099
    %v2101 = vpop.f32.mrb[0].mxu0
    %v2102 = vpop.f32.mrb[0].mxu0
    %v2103 = vadd.f32 %v1644, %v2102
    %v2104 = vpop.f32.mrb[0].mxu0
    %2105 = vmatprep.mubr.bf16.mxu0 0
    %2106 = vmatmul.mubr.bf16.gmra.mrb[0].mxu0 %v1596
    %v2107 = vpop.f32.mrb[0].mxu0
    %v2108 = vadd.f32 %v1644, %v2107
    %v2109 = vpop.f32.mrb[0].mxu0
    %v2110 = vpop.f32.mrb[0].mxu0
    %v2111 = vadd.f32 %v1644, %v2110
    %v2112 = vpop.f32.mrb[0].mxu0
    %2113 = vmatprep.mubr.bf16.mxu0 0
    %2114 = vmatmul.mubr.bf16.gmra.mrb[0].mxu0 %v1597
    %v2115 = vpop.f32.mrb[0].mxu0
    %v2116 = vadd.f32 %v1644, %v2115
    %v2117 = vpop.f32.mrb[0].mxu0
    %v2118 = vpop.f32.mrb[0].mxu0
    %v2119 = vadd.f32 %v1644, %v2118
    %v2120 = vpop.f32.mrb[0].mxu0
    %2121 = vmatprep.mubr.bf16.mxu0 0
    %2122 = vmatmul.mubr.bf16.gmra.mrb[0].mxu0 %v1598
    %v2123 = vpop.f32.mrb[0].mxu0
    %v2124 = vadd.f32 %v1644, %v2123
    %v2125 = vpop.f32.mrb[0].mxu0
    %v2126 = vpop.f32.mrb[0].mxu0
    %v2127 = vadd.f32 %v1644, %v2126
    %v2128 = vpop.f32.mrb[0].mxu0
    %2129 = vdwg.mxu0
    %2130 = vst [vmem:[#allocation8] sm:$0xff] %v1811
    %2131 = vst [vmem:[#allocation8 + $0x8] sm:$0xff] %v1813
    %2132 = vst [vmem:[#allocation8 + $0x10] sm:$0xff] %v2004
    %2133 = vst [vmem:[#allocation8 + $0x18] sm:$0xff] %v1815
    %2134 = vst [vmem:[#allocation8 + $0x20] sm:$0xff] %v1817
    %2135 = vst [vmem:[#allocation8 + $0x28] sm:$0xff] %v2007
    %2136 = vst [vmem:[#allocation8 + $0x30] sm:$0xff] %v1821
    %2137 = vst [vmem:[#allocation8 + $0x38] sm:$0xff] %v1823
    %2138 = vst [vmem:[#allocation8 + $0x40] sm:$0xff] %v2012
    %2139 = vst [vmem:[#allocation8 + $0x48] sm:$0xff] %v1825
    %2140 = vst [vmem:[#allocation8 + $0x50] sm:$0xff] %v1827
    %2141 = vst [vmem:[#allocation8 + $0x58] sm:$0xff] %v2015
    %2142 = vst [vmem:[#allocation8 + $0x60] sm:$0xff] %v1831
    %2143 = vst [vmem:[#allocation8 + $0x68] sm:$0xff] %v1833
    %2144 = vst [vmem:[#allocation8 + $0x70] sm:$0xff] %v2020
    %2145 = vst [vmem:[#allocation8 + $0x78] sm:$0xff] %v1835
    %2146 = vst [vmem:[#allocation8 + $0x80] sm:$0xff] %v1837
    %2147 = vst [vmem:[#allocation8 + $0x88] sm:$0xff] %v2023
    %2148 = vst [vmem:[#allocation8 + $0x90] sm:$0xff] %v1841
    %2149 = vst [vmem:[#allocation8 + $0x98] sm:$0xff] %v1843
    %2150 = vst [vmem:[#allocation8 + $0xa0] sm:$0xff] %v2028
    %2151 = vst [vmem:[#allocation8 + $0xa8] sm:$0xff] %v1845
    %2152 = vst [vmem:[#allocation8 + $0xb0] sm:$0xff] %v1847
    %2153 = vst [vmem:[#allocation8 + $0xb8] sm:$0xff] %v2031
    %2154 = vst [vmem:[#allocation8 + $0xc0] sm:$0xff] %v1851
    %2155 = vst [vmem:[#allocation8 + $0xc8] sm:$0xff] %v1853
    %2156 = vst [vmem:[#allocation8 + $0xd0] sm:$0xff] %v2036
    %2157 = vst [vmem:[#allocation8 + $0xd8] sm:$0xff] %v1855
    %2158 = vst [vmem:[#allocation8 + $0xe0] sm:$0xff] %v1857
    %2159 = vst [vmem:[#allocation8 + $0xe8] sm:$0xff] %v2039
    %2160 = vst [vmem:[#allocation8 + $0xf0] sm:$0xff] %v1861
    %2161 = vst [vmem:[#allocation8 + $0xf8] sm:$0xff] %v1863
    %2162 = vst [vmem:[#allocation8 + $0x100] sm:$0xff] %v2044
    %2163 = vst [vmem:[#allocation8 + $0x108] sm:$0xff] %v1865
    %2164 = vst [vmem:[#allocation8 + $0x110] sm:$0xff] %v1867
    %2165 = vst [vmem:[#allocation8 + $0x118] sm:$0xff] %v2047
    %2166 = vst [vmem:[#allocation8 + $0x120] sm:$0xff] %v1871
    %2167 = vst [vmem:[#allocation8 + $0x128] sm:$0xff] %v1873
    %2168 = vst [vmem:[#allocation8 + $0x130] sm:$0xff] %v2052
    %2169 = vst [vmem:[#allocation8 + $0x138] sm:$0xff] %v1875
    %2170 = vst [vmem:[#allocation8 + $0x140] sm:$0xff] %v1877
    %2171 = vst [vmem:[#allocation8 + $0x148] sm:$0xff] %v2055
    %2172 = vst [vmem:[#allocation8 + $0x150] sm:$0xff] %v1881
    %2173 = vst [vmem:[#allocation8 + $0x158] sm:$0xff] %v1883
    %2174 = vst [vmem:[#allocation8 + $0x160] sm:$0xff] %v2060
    %2175 = vst [vmem:[#allocation8 + $0x168] sm:$0xff] %v1885
    %2176 = vst [vmem:[#allocation8 + $0x170] sm:$0xff] %v1887
    %2177 = vst [vmem:[#allocation8 + $0x178] sm:$0xff] %v2063
    %2178 = vst [vmem:[#allocation8 + $0x180] sm:$0xff] %v1891
    %2179 = vst [vmem:[#allocation8 + $0x188] sm:$0xff] %v1893
    %2180 = vst [vmem:[#allocation8 + $0x190] sm:$0xff] %v2068
    %2181 = vst [vmem:[#allocation8 + $0x198] sm:$0xff] %v1895
    %2182 = vst [vmem:[#allocation8 + $0x1a0] sm:$0xff] %v1897
    %2183 = vst [vmem:[#allocation8 + $0x1a8] sm:$0xff] %v2071
    %2184 = vst [vmem:[#allocation8 + $0x1b0] sm:$0xff] %v1901
    %2185 = vst [vmem:[#allocation8 + $0x1b8] sm:$0xff] %v1903
    %2186 = vst [vmem:[#allocation8 + $0x1c0] sm:$0xff] %v2076
    %2187 = vst [vmem:[#allocation8 + $0x1c8] sm:$0xff] %v1905
    %2188 = vst [vmem:[#allocation8 + $0x1d0] sm:$0xff] %v1907
    %2189 = vst [vmem:[#allocation8 + $0x1d8] sm:$0xff] %v2079
    %2190 = vst [vmem:[#allocation8 + $0x1e0] sm:$0xff] %v1911
    %2191 = vst [vmem:[#allocation8 + $0x1e8] sm:$0xff] %v1913
    %2192 = vst [vmem:[#allocation8 + $0x1f0] sm:$0xff] %v2084
    %2193 = vst [vmem:[#allocation8 + $0x1f8] sm:$0xff] %v1915
    %2194 = vst [vmem:[#allocation8 + $0x200] sm:$0xff] %v1917
    %2195 = vst [vmem:[#allocation8 + $0x208] sm:$0xff] %v2087
    %2196 = vst [vmem:[#allocation8 + $0x210] sm:$0xff] %v1921
    %2197 = vst [vmem:[#allocation8 + $0x218] sm:$0xff] %v1923
    %2198 = vst [vmem:[#allocation8 + $0x220] sm:$0xff] %v2092
    %2199 = vst [vmem:[#allocation8 + $0x228] sm:$0xff] %v1925
    %2200 = vst [vmem:[#allocation8 + $0x230] sm:$0xff] %v1927
    %2201 = vst [vmem:[#allocation8 + $0x238] sm:$0xff] %v2095
    %2202 = vst [vmem:[#allocation8 + $0x240] sm:$0xff] %v1931
    %2203 = vst [vmem:[#allocation8 + $0x248] sm:$0xff] %v1933
    %2204 = vst [vmem:[#allocation8 + $0x250] sm:$0xff] %v2100
    %2205 = vst [vmem:[#allocation8 + $0x258] sm:$0xff] %v1935
    %2206 = vst [vmem:[#allocation8 + $0x260] sm:$0xff] %v1937
    %2207 = vst [vmem:[#allocation8 + $0x268] sm:$0xff] %v2103
    %2208 = vst [vmem:[#allocation8 + $0x270] sm:$0xff] %v1941
    %2209 = vst [vmem:[#allocation8 + $0x278] sm:$0xff] %v1943
    %2210 = vst [vmem:[#allocation8 + $0x280] sm:$0xff] %v2108
    %2211 = vst [vmem:[#allocation8 + $0x288] sm:$0xff] %v1945
    %2212 = vst [vmem:[#allocation8 + $0x290] sm:$0xff] %v1947
    %2213 = vst [vmem:[#allocation8 + $0x298] sm:$0xff] %v2111
    %2214 = vst [vmem:[#allocation8 + $0x2a0] sm:$0xff] %v1951
    %2215 = vst [vmem:[#allocation8 + $0x2a8] sm:$0xff] %v1953
    %2216 = vst [vmem:[#allocation8 + $0x2b0] sm:$0xff] %v2116
    %2217 = vst [vmem:[#allocation8 + $0x2b8] sm:$0xff] %v1955
    %2218 = vst [vmem:[#allocation8 + $0x2c0] sm:$0xff] %v1957
    %2219 = vst [vmem:[#allocation8 + $0x2c8] sm:$0xff] %v2119
    %2220 = vst [vmem:[#allocation8 + $0x2d0] sm:$0xff] %v1961
    %2221 = vst [vmem:[#allocation8 + $0x2d8] sm:$0xff] %v1963
    %2222 = vst [vmem:[#allocation8 + $0x2e0] sm:$0xff] %v2124
    %2223 = vst [vmem:[#allocation8 + $0x2e8] sm:$0xff] %v1965
    %2224 = vst [vmem:[#allocation8 + $0x2f0] sm:$0xff] %v1967
    %2225 = vst [vmem:[#allocation8 + $0x2f8] sm:$0xff] %v2127
    // Predicated region
    $region34: #{tpu_custom_call.1} parent=1 // pred_check
      _
    $region35: #{tpu_custom_call.1} parent=1 // pred_check_branch
      %2227 = sbr.rel (0) target = $region37
    $region36: #{tpu_custom_call.1} parent=1 // pred_region
      %s2229 = ssub.s32 12288, 12288
      %2230 = vsyncadd [#allocation4], %s2229
      %s2231 = sshll.u32 [#allocation8], 4
      %s2232 = int_to_ptr.vmem [resolvable:$true] %s2231
      %2237 = dma.vmem_to_hbm [thread:$0]  %s2232, 12288, %s5, [#allocation4], 384, 384, 24
    $region37: #{tpu_custom_call.1} parent=1 // pred_fallthru
      _
    // Predicated region
    $region38: #{tpu_custom_call.1} parent=1 // pred_check
      _
    $region39: #{tpu_custom_call.1} parent=1 // pred_check_branch
      %2239 = sbr.rel (0) target = $region41
    $region40: #{tpu_custom_call.1} parent=1 // pred_region
      %2240 = dma.done [#allocation4], 12288
    $region41: #{tpu_custom_call.1} parent=1 // pred_fallthru
      _
    %2241 = vsyncpa [#allocation3], 1
    %2242 = vsyncpa [#allocation6], 1
    %2243 = vsyncpa [#allocation4], 1

</llo_original>
